<compile_context>
chip_gen: v7x
topology: tpu7x:2x2x1
jax: 0.10.0
libtpu: 0.0.40
codegen_flags: <defaults>
</compile_context>

<pallas_src>
import numpy as np
import jax
import jax.numpy as jnp
from jax import lax
from jax.experimental import pallas as pl
from jax.experimental.pallas import tpu as pltpu


# ----------------------------------------------------------------------------------
# Pass 1: per (batch, channel) plane -- grouped 3x3 convs (VPU MACs) + BN statistics
# ----------------------------------------------------------------------------------
def dhfe_pass1_kernel(xee_ref, xeo_ref, xoe_ref, xoo_ref, w_ref,
                      h2_ref, sum_ref, ssq_ref, h1a_ref, h1b_ref):
    Ho, Wo = h2_ref.shape

    # even/odd phase views of the zero-padded input plane, each (Ho+1, Wo+1)
    xee = xee_ref[...]
    xeo = xeo_ref[...]
    xoe = xoe_ref[...]
    xoo = xoo_ref[...]
    w = w_ref[...]                       # (1, 36): [w1a(9) | w1b(9) | w2a(9) | w2b(9)]

    # ---- conv #1: depthwise 3x3, stride 2 (this channel -> two output planes) ----
    # Tap t = 3*ki + kj of x_pad[2i+ki, 2j+kj] expressed through the phase views;
    # every tap is a {0,1}-offset static slice, no strided lane gathers.
    taps = (
        (xee, 0, 0), (xeo, 0, 0), (xee, 0, 1),    # ki = 0
        (xoe, 0, 0), (xoo, 0, 0), (xoe, 0, 1),    # ki = 1
        (xee, 1, 0), (xeo, 1, 0), (xee, 1, 1),    # ki = 2
    )
    h1a = jnp.zeros((Ho, Wo), jnp.float32)
    h1b = jnp.zeros((Ho, Wo), jnp.float32)
    for t, (phase, di, dj) in enumerate(taps):    # static 9-tap unroll
        p = phase[di:di + Ho, dj:dj + Wo]
        h1a = h1a + p * w[0:1, t:t + 1]
        h1b = h1b + p * w[0:1, 9 + t:10 + t]

    # ---- stage h1a/h1b into scratch with a zero halo ring (pad=1 of conv #2) ----
    # Only the thin ring is zeroed (v5e has a single vector-store slot); the interior
    # is fully overwritten every step, so grid steps stay independent ("parallel").
    zrow = jnp.zeros((1, Wo + 2), jnp.float32)
    zcol = jnp.zeros((Ho, 1), jnp.float32)
    for h1_ref, h1 in ((h1a_ref, h1a), (h1b_ref, h1b)):
        h1_ref[0:1, :] = zrow
        h1_ref[Ho + 1:Ho + 2, :] = zrow
        h1_ref[1:Ho + 1, 0:1] = zcol
        h1_ref[1:Ho + 1, Wo + 1:Wo + 2] = zcol
        h1_ref[1:Ho + 1, 1:Wo + 1] = h1

    # ---- conv #2: grouped 3x3, stride 1, pad 1 (2 planes -> 1 plane, VPU MACs) ----
    h1a_p = h1a_ref[...]                 # single reload of each scratch, then value slices
    h1b_p = h1b_ref[...]
    h2 = jnp.zeros((Ho, Wo), jnp.float32)
    for ki in range(3):
        for kj in range(3):
            t = 3 * ki + kj
            h2 = (h2
                  + h1a_p[ki:ki + Ho, kj:kj + Wo] * w[0:1, 18 + t:19 + t]
                  + h1b_p[ki:ki + Ho, kj:kj + Wo] * w[0:1, 27 + t:28 + t])

    h2_ref[...] = h2

    # ---- per-(image, channel) BatchNorm partial statistics (finalised in wrapper) ----
    sum_ref[...] = jnp.sum(h2, keepdims=True)
    ssq_ref[...] = jnp.sum(h2 * h2, keepdims=True)


# ----------------------------------------------------------------------------------
# Pass 2: per (batch, row slab) -- BN affine + ReLU + 1x1 conv (VPU MACs) + sigmoid,
#         written directly in PyTorch NCHW layout (no wrapper output transpose).
# ----------------------------------------------------------------------------------
def dhfe_pass2_kernel(h2_ref, scale_ref, shift_ref, wp_ref, bp_ref, out_ref):
    C, TR, Wo = h2_ref.shape
    O = out_ref.shape[0]

    # channel_shuffle(x, groups=C) with exactly C channels is the identity -> no-op.
    ys = []
    for c in range(C):                                # static unroll (small C here;
        y = h2_ref[c]                                 #  use fori_loop / bf16 MXU matmul
        y = y * scale_ref[0:1, c:c + 1] + shift_ref[0:1, c:c + 1]   # for C,O >= 128)
        ys.append(jnp.maximum(y, 0.0))

    for o in range(O):
        z = jnp.zeros((TR, Wo), jnp.float32)
        for c in range(C):
            z = z + ys[c] * wp_ref[o:o + 1, c:c + 1]
        z = z + bp_ref[0:1, o:o + 1]
        # sigmoid: exp rides the EUP slot; exact reciprocal keeps the strict tolerance.
        # (pl.reciprocal(..., approx=True) is the cheaper option if tolerance allows.)
        out_ref[o] = pl.reciprocal(1.0 + jnp.exp(-z))


def _pick_row_tile(Ho, Wo, C, O, budget_bytes=16 << 20):
    """Largest pass-2 row slab whose double-buffered (C+O)-plane tiles fit the budget.

    Blocks stay far below every generation's scoped-VMEM default, so TR == Ho in
    practice; the divisor walk only kicks in for extreme Ho.  (A cdiv + masked-tail
    grid would drop the divisor requirement entirely -- review note -- but is not
    needed at these block sizes.)
    """
    per_row = 2 * (C + O) * Wo * 4                    # in + out, double-buffered, f32
    if Ho * per_row <= budget_bytes:
        return Ho
    best = None
    for tr in range(8, Ho, 8):                        # keep (8,128) tiling friendly
        if Ho % tr == 0 and tr * per_row <= budget_bytes:
            best = tr
    return best if best is not None else Ho


def dhfe_down_block2d(x_nchw, w1, w2, gamma, beta, wp, bp):
    B, C, H, W = x_nchw.shape
    O = wp.shape[0]
    assert H % 2 == 0 and W % 2 == 0, "even H, W assumed"
    # TODO(synk): odd H/W would need the (H+1)//2 output-size rule and ragged phases.
    Ho, Wo = H // 2, W // 2

    # ---- stride-2 phase split of the padded input (single fused XLA pad+slice pass) ----
    # TODO(synk): stride-2 column gathers have no cheap Mosaic lane-compaction
    # primitive, so this one HBM re-layout stays outside the kernels; every stride-2
    # tap then becomes a {0,1}-offset static slice in pass 1.
    xp = jnp.pad(x_nchw, ((0, 0), (0, 0), (1, 1), (1, 1)))      # (B, C, H+2, W+2)
    xee = xp[:, :, 0::2, 0::2]                                   # (B, C, Ho+1, Wo+1)
    xeo = xp[:, :, 0::2, 1::2]
    xoe = xp[:, :, 1::2, 0::2]
    xoo = xp[:, :, 1::2, 1::2]

    # ---- per-channel scalar weight table: (C, 1, 36) = [w1a | w1b | w2a | w2b] ----
    w1r = w1.reshape(C, 2, 9)                                    # (c, out-of-pair, tap)
    w2r = w2.reshape(C, 2, 9)                                    # (c, in-of-pair, tap)
    wpack = jnp.concatenate([w1r[:, 0], w1r[:, 1], w2r[:, 0], w2r[:, 1]],
                            axis=1).reshape(C, 1, 36)

    phase_spec = pl.BlockSpec((None, None, Ho + 1, Wo + 1), lambda b, c: (b, c, 0, 0))

    # ---- pass 1: grouped convs + BN statistics, grid over (batch, channel) ----
    h2, psum, pssq = pl.pallas_call(
        dhfe_pass1_kernel,
        out_shape=(
            jax.ShapeDtypeStruct((B, C, Ho, Wo), jnp.float32),
            jax.ShapeDtypeStruct((B, C, 1, 1), jnp.float32),
            jax.ShapeDtypeStruct((B, C, 1, 1), jnp.float32),
        ),
        grid=(B, C),
        in_specs=[phase_spec, phase_spec, phase_spec, phase_spec,
                  pl.BlockSpec((None, 1, 36), lambda b, c: (c, 0, 0))],
        out_specs=(
            pl.BlockSpec((None, None, Ho, Wo), lambda b, c: (b, c, 0, 0)),
            pl.BlockSpec((None, None, 1, 1), lambda b, c: (b, c, 0, 0)),
            pl.BlockSpec((None, None, 1, 1), lambda b, c: (b, c, 0, 0)),
        ),
        scratch_shapes=[pltpu.VMEM((Ho + 2, Wo + 2), jnp.float32),   # h1, even out chan
                        pltpu.VMEM((Ho + 2, Wo + 2), jnp.float32)],  # h1, odd out chan
        compiler_params=pltpu.CompilerParams(
            dimension_semantics=("parallel", "parallel"),            # megacore-shardable
        ),
    )(xee, xeo, xoe, xoo, wpack)

    # ---- finalise BatchNorm from the tiny (C,) statistics; fold into one affine ----
    n = float(B * Ho * Wo)
    s = jnp.sum(psum, axis=(0, 2, 3))                            # (C,)
    ss = jnp.sum(pssq, axis=(0, 2, 3))
    mean = s / n
    var = jnp.maximum(ss / n - mean * mean, 0.0)
    inv = lax.rsqrt(var + 1e-5)
    scale = (gamma * inv).reshape(1, C)
    shift = (beta - mean * gamma * inv).reshape(1, C)

    # ---- pass 2: BN affine + ReLU + 1x1 conv + sigmoid, grid over (batch, row slab) ----
    wp2 = wp.reshape(O, C)
    bp2 = bp.reshape(1, O)
    TR = _pick_row_tile(Ho, Wo, C, O)

    out = pl.pallas_call(
        dhfe_pass2_kernel,
        out_shape=jax.ShapeDtypeStruct((B, O, Ho, Wo), jnp.float32),   # PyTorch NCHW
        grid=(B, Ho // TR),
        in_specs=[
            pl.BlockSpec((None, C, TR, Wo), lambda b, r: (b, 0, r, 0)),
            pl.BlockSpec((1, C), lambda b, r: (0, 0)),
            pl.BlockSpec((1, C), lambda b, r: (0, 0)),
            pl.BlockSpec((O, C), lambda b, r: (0, 0)),
            pl.BlockSpec((1, O), lambda b, r: (0, 0)),
        ],
        out_specs=pl.BlockSpec((None, O, TR, Wo), lambda b, r: (b, 0, r, 0)),
        compiler_params=pltpu.CompilerParams(
            dimension_semantics=("parallel", "parallel"),
        ),
    )(h2, scale, shift, wp2, bp2)

    return out                                                   # already NCHW


def make_params(key, in_channels, out_channels):
    C, O = in_channels, out_channels
    k1, k2, k3, k4, k5, k6 = jax.random.split(key, 6)
    w1 = jax.random.normal(k1, (2 * C, 1, 3, 3), jnp.float32) * 0.3
    w2 = jax.random.normal(k2, (C, 2, 3, 3), jnp.float32) * 0.3
    gamma = 1.0 + 0.1 * jax.random.normal(k3, (C,), jnp.float32)
    beta = 0.1 * jax.random.normal(k4, (C,), jnp.float32)
    wp = jax.random.normal(k5, (O, C, 1, 1), jnp.float32) * 0.3
    bp = 0.1 * jax.random.normal(k6, (O,), jnp.float32)
    return w1, w2, gamma, beta, wp, bp


def reference_forward(x, w1, w2, gamma, beta, wp, bp):
    """Pure-JAX (XLA conv) reference with the same PyTorch semantics."""
    B, C, H, W = x.shape
    dn = ('NCHW', 'OIHW', 'NCHW')
    h = lax.conv_general_dilated(x, w1, (2, 2), [(1, 1), (1, 1)],
                                 dimension_numbers=dn, feature_group_count=C)
    h = lax.conv_general_dilated(h, w2, (1, 1), [(1, 1), (1, 1)],
                                 dimension_numbers=dn, feature_group_count=C)
    mean = jnp.mean(h, axis=(0, 2, 3), keepdims=True)
    var = jnp.mean((h - mean) ** 2, axis=(0, 2, 3), keepdims=True)
    h = (h - mean) / jnp.sqrt(var + 1e-5) * gamma.reshape(1, C, 1, 1) \
        + beta.reshape(1, C, 1, 1)
    h = jnp.maximum(h, 0.0)
    # channel_shuffle with groups == num_channels is the identity
    z = lax.conv_general_dilated(h, wp, (1, 1), [(0, 0), (0, 0)],
                                 dimension_numbers=dn) + bp.reshape(1, -1, 1, 1)
    return jax.nn.sigmoid(z)


if __name__ == "__main__":
    B, C, O, H, W = 2, 4, 8, 16, 16
    key = jax.random.PRNGKey(0)
    kx, kp = jax.random.split(key)
    x = jax.random.normal(kx, (B, C, H, W), jnp.float32)
    w1, w2, gamma, beta, wp, bp = make_params(kp, C, O)

    fwd = jax.jit(dhfe_down_block2d)        # jit so the wrapper pad/slice/finalise fuse
    out = fwd(x, w1, w2, gamma, beta, wp, bp)
    out = jax.block_until_ready(out)

    ref = reference_forward(x, w1, w2, gamma, beta, wp, bp)
    np.testing.assert_allclose(np.asarray(out), np.asarray(ref),
                               rtol=2e-4, atol=2e-5)
    print("KERNEL_OK")
</pallas_src>

<mosaic_0001>
module attributes {stable_mosaic.version = 11 : i64} {
  func.func @dhfe_pass1_kernel(%arg0: i32, %arg1: i32, %arg2: memref<1x1x9x9xf32, #tpu.memory_space<vmem>>, %arg3: memref<1x1x9x9xf32, #tpu.memory_space<vmem>>, %arg4: memref<1x1x9x9xf32, #tpu.memory_space<vmem>>, %arg5: memref<1x1x9x9xf32, #tpu.memory_space<vmem>>, %arg6: memref<1x1x36xf32, #tpu.memory_space<vmem>>, %arg7: memref<1x1x8x8xf32, #tpu.memory_space<vmem>>, %arg8: memref<1x1x1x1xf32, #tpu.memory_space<vmem>>, %arg9: memref<1x1x1x1xf32, #tpu.memory_space<vmem>>, %arg10: memref<10x10xf32, #tpu.memory_space<vmem>>, %arg11: memref<10x10xf32, #tpu.memory_space<vmem>>) attributes {dimension_semantics = [#tpu.dimension_semantics<parallel>, #tpu.dimension_semantics<parallel>], iteration_bounds = array<i64: 2, 4>, scalar_prefetch = 0 : i64, scratch_operands = 2 : i64, tpu.core_type = #tpu.core_type<tc>, window_params = [{transform_indices = @transform_0, window_bounds = array<i64: 1, 1, 9, 9>}, {transform_indices = @transform_1, window_bounds = array<i64: 1, 1, 9, 9>}, {transform_indices = @transform_2, window_bounds = array<i64: 1, 1, 9, 9>}, {transform_indices = @transform_3, window_bounds = array<i64: 1, 1, 9, 9>}, {transform_indices = @transform_4, window_bounds = array<i64: 1, 1, 36>}, {transform_indices = @transform_5, window_bounds = array<i64: 1, 1, 8, 8>}, {transform_indices = @transform_6, window_bounds = array<i64: 1, 1, 1, 1>}, {transform_indices = @transform_7, window_bounds = array<i64: 1, 1, 1, 1>}]} {
    %c0 = arith.constant 0 : index
    %c0_0 = arith.constant 0 : index
    %c0_1 = arith.constant 0 : index
    %c0_2 = arith.constant 0 : index
    %0 = vector.load %arg2[%c0, %c0_0, %c0_1, %c0_2] : memref<1x1x9x9xf32, #tpu.memory_space<vmem>>, vector<1x1x9x9xf32>
    %1 = vector.shape_cast %0 : vector<1x1x9x9xf32> to vector<9x9xf32>
    %c0_3 = arith.constant 0 : index
    %c0_4 = arith.constant 0 : index
    %c0_5 = arith.constant 0 : index
    %c0_6 = arith.constant 0 : index
    %2 = vector.load %arg3[%c0_3, %c0_4, %c0_5, %c0_6] : memref<1x1x9x9xf32, #tpu.memory_space<vmem>>, vector<1x1x9x9xf32>
    %3 = vector.shape_cast %2 : vector<1x1x9x9xf32> to vector<9x9xf32>
    %c0_7 = arith.constant 0 : index
    %c0_8 = arith.constant 0 : index
    %c0_9 = arith.constant 0 : index
    %c0_10 = arith.constant 0 : index
    %4 = vector.load %arg4[%c0_7, %c0_8, %c0_9, %c0_10] : memref<1x1x9x9xf32, #tpu.memory_space<vmem>>, vector<1x1x9x9xf32>
    %5 = vector.shape_cast %4 : vector<1x1x9x9xf32> to vector<9x9xf32>
    %c0_11 = arith.constant 0 : index
    %c0_12 = arith.constant 0 : index
    %c0_13 = arith.constant 0 : index
    %c0_14 = arith.constant 0 : index
    %6 = vector.load %arg5[%c0_11, %c0_12, %c0_13, %c0_14] : memref<1x1x9x9xf32, #tpu.memory_space<vmem>>, vector<1x1x9x9xf32>
    %7 = vector.shape_cast %6 : vector<1x1x9x9xf32> to vector<9x9xf32>
    %c0_15 = arith.constant 0 : index
    %c0_16 = arith.constant 0 : index
    %c0_17 = arith.constant 0 : index
    %8 = vector.load %arg6[%c0_15, %c0_16, %c0_17] : memref<1x1x36xf32, #tpu.memory_space<vmem>>, vector<1x1x36xf32>
    %9 = vector.shape_cast %8 : vector<1x1x36xf32> to vector<1x36xf32>
    %cst = arith.constant 0.000000e+00 : f32
    %10 = vector.broadcast %cst : f32 to vector<8x8xf32>
    %cst_18 = arith.constant 0.000000e+00 : f32
    %11 = vector.broadcast %cst_18 : f32 to vector<8x8xf32>
    %12 = vector.extract_strided_slice %1 {offsets = [0, 0], sizes = [8, 8], strides = [1, 1]} : vector<9x9xf32> to vector<8x8xf32>
    %13 = vector.extract_strided_slice %9 {offsets = [0, 0], sizes = [1, 1], strides = [1, 1]} : vector<1x36xf32> to vector<1x1xf32>
    %14 = vector.broadcast %13 : vector<1x1xf32> to vector<8x8xf32>
    %15 = arith.mulf %12, %14 : vector<8x8xf32>
    %16 = arith.addf %10, %15 : vector<8x8xf32>
    %17 = vector.extract_strided_slice %9 {offsets = [0, 9], sizes = [1, 1], strides = [1, 1]} : vector<1x36xf32> to vector<1x1xf32>
    %18 = vector.broadcast %17 : vector<1x1xf32> to vector<8x8xf32>
    %19 = arith.mulf %12, %18 : vector<8x8xf32>
    %20 = arith.addf %11, %19 : vector<8x8xf32>
    %21 = vector.extract_strided_slice %3 {offsets = [0, 0], sizes = [8, 8], strides = [1, 1]} : vector<9x9xf32> to vector<8x8xf32>
    %22 = vector.extract_strided_slice %9 {offsets = [0, 1], sizes = [1, 1], strides = [1, 1]} : vector<1x36xf32> to vector<1x1xf32>
    %23 = vector.broadcast %22 : vector<1x1xf32> to vector<8x8xf32>
    %24 = arith.mulf %21, %23 : vector<8x8xf32>
    %25 = arith.addf %16, %24 : vector<8x8xf32>
    %26 = vector.extract_strided_slice %9 {offsets = [0, 10], sizes = [1, 1], strides = [1, 1]} : vector<1x36xf32> to vector<1x1xf32>
    %27 = vector.broadcast %26 : vector<1x1xf32> to vector<8x8xf32>
    %28 = arith.mulf %21, %27 : vector<8x8xf32>
    %29 = arith.addf %20, %28 : vector<8x8xf32>
    %30 = vector.extract_strided_slice %1 {offsets = [0, 1], sizes = [8, 8], strides = [1, 1]} : vector<9x9xf32> to vector<8x8xf32>
    %31 = vector.extract_strided_slice %9 {offsets = [0, 2], sizes = [1, 1], strides = [1, 1]} : vector<1x36xf32> to vector<1x1xf32>
    %32 = vector.broadcast %31 : vector<1x1xf32> to vector<8x8xf32>
    %33 = arith.mulf %30, %32 : vector<8x8xf32>
    %34 = arith.addf %25, %33 : vector<8x8xf32>
    %35 = vector.extract_strided_slice %9 {offsets = [0, 11], sizes = [1, 1], strides = [1, 1]} : vector<1x36xf32> to vector<1x1xf32>
    %36 = vector.broadcast %35 : vector<1x1xf32> to vector<8x8xf32>
    %37 = arith.mulf %30, %36 : vector<8x8xf32>
    %38 = arith.addf %29, %37 : vector<8x8xf32>
    %39 = vector.extract_strided_slice %5 {offsets = [0, 0], sizes = [8, 8], strides = [1, 1]} : vector<9x9xf32> to vector<8x8xf32>
    %40 = vector.extract_strided_slice %9 {offsets = [0, 3], sizes = [1, 1], strides = [1, 1]} : vector<1x36xf32> to vector<1x1xf32>
    %41 = vector.broadcast %40 : vector<1x1xf32> to vector<8x8xf32>
    %42 = arith.mulf %39, %41 : vector<8x8xf32>
    %43 = arith.addf %34, %42 : vector<8x8xf32>
    %44 = vector.extract_strided_slice %9 {offsets = [0, 12], sizes = [1, 1], strides = [1, 1]} : vector<1x36xf32> to vector<1x1xf32>
    %45 = vector.broadcast %44 : vector<1x1xf32> to vector<8x8xf32>
    %46 = arith.mulf %39, %45 : vector<8x8xf32>
    %47 = arith.addf %38, %46 : vector<8x8xf32>
    %48 = vector.extract_strided_slice %7 {offsets = [0, 0], sizes = [8, 8], strides = [1, 1]} : vector<9x9xf32> to vector<8x8xf32>
    %49 = vector.extract_strided_slice %9 {offsets = [0, 4], sizes = [1, 1], strides = [1, 1]} : vector<1x36xf32> to vector<1x1xf32>
    %50 = vector.broadcast %49 : vector<1x1xf32> to vector<8x8xf32>
    %51 = arith.mulf %48, %50 : vector<8x8xf32>
    %52 = arith.addf %43, %51 : vector<8x8xf32>
    %53 = vector.extract_strided_slice %9 {offsets = [0, 13], sizes = [1, 1], strides = [1, 1]} : vector<1x36xf32> to vector<1x1xf32>
    %54 = vector.broadcast %53 : vector<1x1xf32> to vector<8x8xf32>
    %55 = arith.mulf %48, %54 : vector<8x8xf32>
    %56 = arith.addf %47, %55 : vector<8x8xf32>
    %57 = vector.extract_strided_slice %5 {offsets = [0, 1], sizes = [8, 8], strides = [1, 1]} : vector<9x9xf32> to vector<8x8xf32>
    %58 = vector.extract_strided_slice %9 {offsets = [0, 5], sizes = [1, 1], strides = [1, 1]} : vector<1x36xf32> to vector<1x1xf32>
    %59 = vector.broadcast %58 : vector<1x1xf32> to vector<8x8xf32>
    %60 = arith.mulf %57, %59 : vector<8x8xf32>
    %61 = arith.addf %52, %60 : vector<8x8xf32>
    %62 = vector.extract_strided_slice %9 {offsets = [0, 14], sizes = [1, 1], strides = [1, 1]} : vector<1x36xf32> to vector<1x1xf32>
    %63 = vector.broadcast %62 : vector<1x1xf32> to vector<8x8xf32>
    %64 = arith.mulf %57, %63 : vector<8x8xf32>
    %65 = arith.addf %56, %64 : vector<8x8xf32>
    %66 = vector.extract_strided_slice %1 {offsets = [1, 0], sizes = [8, 8], strides = [1, 1]} : vector<9x9xf32> to vector<8x8xf32>
    %67 = vector.extract_strided_slice %9 {offsets = [0, 6], sizes = [1, 1], strides = [1, 1]} : vector<1x36xf32> to vector<1x1xf32>
    %68 = vector.broadcast %67 : vector<1x1xf32> to vector<8x8xf32>
    %69 = arith.mulf %66, %68 : vector<8x8xf32>
    %70 = arith.addf %61, %69 : vector<8x8xf32>
    %71 = vector.extract_strided_slice %9 {offsets = [0, 15], sizes = [1, 1], strides = [1, 1]} : vector<1x36xf32> to vector<1x1xf32>
    %72 = vector.broadcast %71 : vector<1x1xf32> to vector<8x8xf32>
    %73 = arith.mulf %66, %72 : vector<8x8xf32>
    %74 = arith.addf %65, %73 : vector<8x8xf32>
    %75 = vector.extract_strided_slice %3 {offsets = [1, 0], sizes = [8, 8], strides = [1, 1]} : vector<9x9xf32> to vector<8x8xf32>
    %76 = vector.extract_strided_slice %9 {offsets = [0, 7], sizes = [1, 1], strides = [1, 1]} : vector<1x36xf32> to vector<1x1xf32>
    %77 = vector.broadcast %76 : vector<1x1xf32> to vector<8x8xf32>
    %78 = arith.mulf %75, %77 : vector<8x8xf32>
    %79 = arith.addf %70, %78 : vector<8x8xf32>
    %80 = vector.extract_strided_slice %9 {offsets = [0, 16], sizes = [1, 1], strides = [1, 1]} : vector<1x36xf32> to vector<1x1xf32>
    %81 = vector.broadcast %80 : vector<1x1xf32> to vector<8x8xf32>
    %82 = arith.mulf %75, %81 : vector<8x8xf32>
    %83 = arith.addf %74, %82 : vector<8x8xf32>
    %84 = vector.extract_strided_slice %1 {offsets = [1, 1], sizes = [8, 8], strides = [1, 1]} : vector<9x9xf32> to vector<8x8xf32>
    %85 = vector.extract_strided_slice %9 {offsets = [0, 8], sizes = [1, 1], strides = [1, 1]} : vector<1x36xf32> to vector<1x1xf32>
    %86 = vector.broadcast %85 : vector<1x1xf32> to vector<8x8xf32>
    %87 = arith.mulf %84, %86 : vector<8x8xf32>
    %88 = arith.addf %79, %87 : vector<8x8xf32>
    %89 = vector.extract_strided_slice %9 {offsets = [0, 17], sizes = [1, 1], strides = [1, 1]} : vector<1x36xf32> to vector<1x1xf32>
    %90 = vector.broadcast %89 : vector<1x1xf32> to vector<8x8xf32>
    %91 = arith.mulf %84, %90 : vector<8x8xf32>
    %92 = arith.addf %83, %91 : vector<8x8xf32>
    %cst_19 = arith.constant 0.000000e+00 : f32
    %93 = vector.broadcast %cst_19 : f32 to vector<1x10xf32>
    %cst_20 = arith.constant 0.000000e+00 : f32
    %94 = vector.broadcast %cst_20 : f32 to vector<8x1xf32>
    %c0_21 = arith.constant 0 : index
    %c0_22 = arith.constant 0 : index
    %95 = vector.load %arg10[%c0_21, %c0_22] : memref<10x10xf32, #tpu.memory_space<vmem>>, vector<1x10xf32>
    tpu.vector_store %arg10[%c0_21, %c0_22], %93 {strides = array<i32>} : memref<10x10xf32, #tpu.memory_space<vmem>>, vector<1x10xf32>,
    %c9 = arith.constant 9 : index
    %c0_23 = arith.constant 0 : index
    %96 = vector.load %arg10[%c9, %c0_23] : memref<10x10xf32, #tpu.memory_space<vmem>>, vector<1x10xf32>
    tpu.vector_store %arg10[%c9, %c0_23], %93 {strides = array<i32>} : memref<10x10xf32, #tpu.memory_space<vmem>>, vector<1x10xf32>,
    %c1 = arith.constant 1 : index
    %c0_24 = arith.constant 0 : index
    %97 = vector.load %arg10[%c1, %c0_24] : memref<10x10xf32, #tpu.memory_space<vmem>>, vector<8x1xf32>
    tpu.vector_store %arg10[%c1, %c0_24], %94 {strides = array<i32>} : memref<10x10xf32, #tpu.memory_space<vmem>>, vector<8x1xf32>,
    %c1_25 = arith.constant 1 : index
    %c9_26 = arith.constant 9 : index
    %98 = vector.load %arg10[%c1_25, %c9_26] : memref<10x10xf32, #tpu.memory_space<vmem>>, vector<8x1xf32>
    tpu.vector_store %arg10[%c1_25, %c9_26], %94 {strides = array<i32>} : memref<10x10xf32, #tpu.memory_space<vmem>>, vector<8x1xf32>,
    %c1_27 = arith.constant 1 : index
    %c1_28 = arith.constant 1 : index
    %99 = vector.load %arg10[%c1_27, %c1_28] : memref<10x10xf32, #tpu.memory_space<vmem>>, vector<8x8xf32>
    tpu.vector_store %arg10[%c1_27, %c1_28], %88 {strides = array<i32>} : memref<10x10xf32, #tpu.memory_space<vmem>>, vector<8x8xf32>,
    %c0_29 = arith.constant 0 : index
    %c0_30 = arith.constant 0 : index
    %100 = vector.load %arg11[%c0_29, %c0_30] : memref<10x10xf32, #tpu.memory_space<vmem>>, vector<1x10xf32>
    tpu.vector_store %arg11[%c0_29, %c0_30], %93 {strides = array<i32>} : memref<10x10xf32, #tpu.memory_space<vmem>>, vector<1x10xf32>,
    %c9_31 = arith.constant 9 : index
    %c0_32 = arith.constant 0 : index
    %101 = vector.load %arg11[%c9_31, %c0_32] : memref<10x10xf32, #tpu.memory_space<vmem>>, vector<1x10xf32>
    tpu.vector_store %arg11[%c9_31, %c0_32], %93 {strides = array<i32>} : memref<10x10xf32, #tpu.memory_space<vmem>>, vector<1x10xf32>,
    %c1_33 = arith.constant 1 : index
    %c0_34 = arith.constant 0 : index
    %102 = vector.load %arg11[%c1_33, %c0_34] : memref<10x10xf32, #tpu.memory_space<vmem>>, vector<8x1xf32>
    tpu.vector_store %arg11[%c1_33, %c0_34], %94 {strides = array<i32>} : memref<10x10xf32, #tpu.memory_space<vmem>>, vector<8x1xf32>,
    %c1_35 = arith.constant 1 : index
    %c9_36 = arith.constant 9 : index
    %103 = vector.load %arg11[%c1_35, %c9_36] : memref<10x10xf32, #tpu.memory_space<vmem>>, vector<8x1xf32>
    tpu.vector_store %arg11[%c1_35, %c9_36], %94 {strides = array<i32>} : memref<10x10xf32, #tpu.memory_space<vmem>>, vector<8x1xf32>,
    %c1_37 = arith.constant 1 : index
    %c1_38 = arith.constant 1 : index
    %104 = vector.load %arg11[%c1_37, %c1_38] : memref<10x10xf32, #tpu.memory_space<vmem>>, vector<8x8xf32>
    tpu.vector_store %arg11[%c1_37, %c1_38], %92 {strides = array<i32>} : memref<10x10xf32, #tpu.memory_space<vmem>>, vector<8x8xf32>,
    %c0_39 = arith.constant 0 : index
    %c0_40 = arith.constant 0 : index
    %105 = vector.load %arg10[%c0_39, %c0_40] : memref<10x10xf32, #tpu.memory_space<vmem>>, vector<10x10xf32>
    %c0_41 = arith.constant 0 : index
    %c0_42 = arith.constant 0 : index
    %106 = vector.load %arg11[%c0_41, %c0_42] : memref<10x10xf32, #tpu.memory_space<vmem>>, vector<10x10xf32>
    %cst_43 = arith.constant 0.000000e+00 : f32
    %107 = vector.broadcast %cst_43 : f32 to vector<8x8xf32>
    %108 = vector.extract_strided_slice %105 {offsets = [0, 0], sizes = [8, 8], strides = [1, 1]} : vector<10x10xf32> to vector<8x8xf32>
    %109 = vector.extract_strided_slice %9 {offsets = [0, 18], sizes = [1, 1], strides = [1, 1]} : vector<1x36xf32> to vector<1x1xf32>
    %110 = vector.broadcast %109 : vector<1x1xf32> to vector<8x8xf32>
    %111 = arith.mulf %108, %110 : vector<8x8xf32>
    %112 = arith.addf %107, %111 : vector<8x8xf32>
    %113 = vector.extract_strided_slice %106 {offsets = [0, 0], sizes = [8, 8], strides = [1, 1]} : vector<10x10xf32> to vector<8x8xf32>
    %114 = vector.extract_strided_slice %9 {offsets = [0, 27], sizes = [1, 1], strides = [1, 1]} : vector<1x36xf32> to vector<1x1xf32>
    %115 = vector.broadcast %114 : vector<1x1xf32> to vector<8x8xf32>
    %116 = arith.mulf %113, %115 : vector<8x8xf32>
    %117 = arith.addf %112, %116 : vector<8x8xf32>
    %118 = vector.extract_strided_slice %105 {offsets = [0, 1], sizes = [8, 8], strides = [1, 1]} : vector<10x10xf32> to vector<8x8xf32>
    %119 = vector.extract_strided_slice %9 {offsets = [0, 19], sizes = [1, 1], strides = [1, 1]} : vector<1x36xf32> to vector<1x1xf32>
    %120 = vector.broadcast %119 : vector<1x1xf32> to vector<8x8xf32>
    %121 = arith.mulf %118, %120 : vector<8x8xf32>
    %122 = arith.addf %117, %121 : vector<8x8xf32>
    %123 = vector.extract_strided_slice %106 {offsets = [0, 1], sizes = [8, 8], strides = [1, 1]} : vector<10x10xf32> to vector<8x8xf32>
    %124 = vector.extract_strided_slice %9 {offsets = [0, 28], sizes = [1, 1], strides = [1, 1]} : vector<1x36xf32> to vector<1x1xf32>
    %125 = vector.broadcast %124 : vector<1x1xf32> to vector<8x8xf32>
    %126 = arith.mulf %123, %125 : vector<8x8xf32>
    %127 = arith.addf %122, %126 : vector<8x8xf32>
    %128 = vector.extract_strided_slice %105 {offsets = [0, 2], sizes = [8, 8], strides = [1, 1]} : vector<10x10xf32> to vector<8x8xf32>
    %129 = vector.extract_strided_slice %9 {offsets = [0, 20], sizes = [1, 1], strides = [1, 1]} : vector<1x36xf32> to vector<1x1xf32>
    %130 = vector.broadcast %129 : vector<1x1xf32> to vector<8x8xf32>
    %131 = arith.mulf %128, %130 : vector<8x8xf32>
    %132 = arith.addf %127, %131 : vector<8x8xf32>
    %133 = vector.extract_strided_slice %106 {offsets = [0, 2], sizes = [8, 8], strides = [1, 1]} : vector<10x10xf32> to vector<8x8xf32>
    %134 = vector.extract_strided_slice %9 {offsets = [0, 29], sizes = [1, 1], strides = [1, 1]} : vector<1x36xf32> to vector<1x1xf32>
    %135 = vector.broadcast %134 : vector<1x1xf32> to vector<8x8xf32>
    %136 = arith.mulf %133, %135 : vector<8x8xf32>
    %137 = arith.addf %132, %136 : vector<8x8xf32>
    %138 = vector.extract_strided_slice %105 {offsets = [1, 0], sizes = [8, 8], strides = [1, 1]} : vector<10x10xf32> to vector<8x8xf32>
    %139 = vector.extract_strided_slice %9 {offsets = [0, 21], sizes = [1, 1], strides = [1, 1]} : vector<1x36xf32> to vector<1x1xf32>
    %140 = vector.broadcast %139 : vector<1x1xf32> to vector<8x8xf32>
    %141 = arith.mulf %138, %140 : vector<8x8xf32>
    %142 = arith.addf %137, %141 : vector<8x8xf32>
    %143 = vector.extract_strided_slice %106 {offsets = [1, 0], sizes = [8, 8], strides = [1, 1]} : vector<10x10xf32> to vector<8x8xf32>
    %144 = vector.extract_strided_slice %9 {offsets = [0, 30], sizes = [1, 1], strides = [1, 1]} : vector<1x36xf32> to vector<1x1xf32>
    %145 = vector.broadcast %144 : vector<1x1xf32> to vector<8x8xf32>
    %146 = arith.mulf %143, %145 : vector<8x8xf32>
    %147 = arith.addf %142, %146 : vector<8x8xf32>
    %148 = vector.extract_strided_slice %105 {offsets = [1, 1], sizes = [8, 8], strides = [1, 1]} : vector<10x10xf32> to vector<8x8xf32>
    %149 = vector.extract_strided_slice %9 {offsets = [0, 22], sizes = [1, 1], strides = [1, 1]} : vector<1x36xf32> to vector<1x1xf32>
    %150 = vector.broadcast %149 : vector<1x1xf32> to vector<8x8xf32>
    %151 = arith.mulf %148, %150 : vector<8x8xf32>
    %152 = arith.addf %147, %151 : vector<8x8xf32>
    %153 = vector.extract_strided_slice %106 {offsets = [1, 1], sizes = [8, 8], strides = [1, 1]} : vector<10x10xf32> to vector<8x8xf32>
    %154 = vector.extract_strided_slice %9 {offsets = [0, 31], sizes = [1, 1], strides = [1, 1]} : vector<1x36xf32> to vector<1x1xf32>
    %155 = vector.broadcast %154 : vector<1x1xf32> to vector<8x8xf32>
    %156 = arith.mulf %153, %155 : vector<8x8xf32>
    %157 = arith.addf %152, %156 : vector<8x8xf32>
    %158 = vector.extract_strided_slice %105 {offsets = [1, 2], sizes = [8, 8], strides = [1, 1]} : vector<10x10xf32> to vector<8x8xf32>
    %159 = vector.extract_strided_slice %9 {offsets = [0, 23], sizes = [1, 1], strides = [1, 1]} : vector<1x36xf32> to vector<1x1xf32>
    %160 = vector.broadcast %159 : vector<1x1xf32> to vector<8x8xf32>
    %161 = arith.mulf %158, %160 : vector<8x8xf32>
    %162 = arith.addf %157, %161 : vector<8x8xf32>
    %163 = vector.extract_strided_slice %106 {offsets = [1, 2], sizes = [8, 8], strides = [1, 1]} : vector<10x10xf32> to vector<8x8xf32>
    %164 = vector.extract_strided_slice %9 {offsets = [0, 32], sizes = [1, 1], strides = [1, 1]} : vector<1x36xf32> to vector<1x1xf32>
    %165 = vector.broadcast %164 : vector<1x1xf32> to vector<8x8xf32>
    %166 = arith.mulf %163, %165 : vector<8x8xf32>
    %167 = arith.addf %162, %166 : vector<8x8xf32>
    %168 = vector.extract_strided_slice %105 {offsets = [2, 0], sizes = [8, 8], strides = [1, 1]} : vector<10x10xf32> to vector<8x8xf32>
    %169 = vector.extract_strided_slice %9 {offsets = [0, 24], sizes = [1, 1], strides = [1, 1]} : vector<1x36xf32> to vector<1x1xf32>
    %170 = vector.broadcast %169 : vector<1x1xf32> to vector<8x8xf32>
    %171 = arith.mulf %168, %170 : vector<8x8xf32>
    %172 = arith.addf %167, %171 : vector<8x8xf32>
    %173 = vector.extract_strided_slice %106 {offsets = [2, 0], sizes = [8, 8], strides = [1, 1]} : vector<10x10xf32> to vector<8x8xf32>
    %174 = vector.extract_strided_slice %9 {offsets = [0, 33], sizes = [1, 1], strides = [1, 1]} : vector<1x36xf32> to vector<1x1xf32>
    %175 = vector.broadcast %174 : vector<1x1xf32> to vector<8x8xf32>
    %176 = arith.mulf %173, %175 : vector<8x8xf32>
    %177 = arith.addf %172, %176 : vector<8x8xf32>
    %178 = vector.extract_strided_slice %105 {offsets = [2, 1], sizes = [8, 8], strides = [1, 1]} : vector<10x10xf32> to vector<8x8xf32>
    %179 = vector.extract_strided_slice %9 {offsets = [0, 25], sizes = [1, 1], strides = [1, 1]} : vector<1x36xf32> to vector<1x1xf32>
    %180 = vector.broadcast %179 : vector<1x1xf32> to vector<8x8xf32>
    %181 = arith.mulf %178, %180 : vector<8x8xf32>
    %182 = arith.addf %177, %181 : vector<8x8xf32>
    %183 = vector.extract_strided_slice %106 {offsets = [2, 1], sizes = [8, 8], strides = [1, 1]} : vector<10x10xf32> to vector<8x8xf32>
    %184 = vector.extract_strided_slice %9 {offsets = [0, 34], sizes = [1, 1], strides = [1, 1]} : vector<1x36xf32> to vector<1x1xf32>
    %185 = vector.broadcast %184 : vector<1x1xf32> to vector<8x8xf32>
    %186 = arith.mulf %183, %185 : vector<8x8xf32>
    %187 = arith.addf %182, %186 : vector<8x8xf32>
    %188 = vector.extract_strided_slice %105 {offsets = [2, 2], sizes = [8, 8], strides = [1, 1]} : vector<10x10xf32> to vector<8x8xf32>
    %189 = vector.extract_strided_slice %9 {offsets = [0, 26], sizes = [1, 1], strides = [1, 1]} : vector<1x36xf32> to vector<1x1xf32>
    %190 = vector.broadcast %189 : vector<1x1xf32> to vector<8x8xf32>
    %191 = arith.mulf %188, %190 : vector<8x8xf32>
    %192 = arith.addf %187, %191 : vector<8x8xf32>
    %193 = vector.extract_strided_slice %106 {offsets = [2, 2], sizes = [8, 8], strides = [1, 1]} : vector<10x10xf32> to vector<8x8xf32>
    %194 = vector.extract_strided_slice %9 {offsets = [0, 35], sizes = [1, 1], strides = [1, 1]} : vector<1x36xf32> to vector<1x1xf32>
    %195 = vector.broadcast %194 : vector<1x1xf32> to vector<8x8xf32>
    %196 = arith.mulf %193, %195 : vector<8x8xf32>
    %197 = arith.addf %192, %196 : vector<8x8xf32>
    %c0_44 = arith.constant 0 : index
    %c0_45 = arith.constant 0 : index
    %c0_46 = arith.constant 0 : index
    %c0_47 = arith.constant 0 : index
    %198 = vector.load %arg7[%c0_44, %c0_45, %c0_46, %c0_47] : memref<1x1x8x8xf32, #tpu.memory_space<vmem>>, vector<1x1x8x8xf32>
    %199 = vector.shape_cast %198 : vector<1x1x8x8xf32> to vector<8x8xf32>
    %200 = vector.shape_cast %197 : vector<8x8xf32> to vector<1x1x8x8xf32>
    tpu.vector_store %arg7[%c0_44, %c0_45, %c0_46, %c0_47], %200 {strides = array<i32>} : memref<1x1x8x8xf32, #tpu.memory_space<vmem>>, vector<1x1x8x8xf32>,
    %201 = vector.shape_cast %197 : vector<8x8xf32> to vector<1x8x8xf32>
    %cst_48 = arith.constant dense<0.000000e+00> : vector<1xf32>
    %202 = vector.multi_reduction <add>, %201, %cst_48 [1, 2] : vector<1x8x8xf32> to vector<1xf32>
    %203 = vector.shape_cast %202 : vector<1xf32> to vector<1x1x1xf32>
    %204 = vector.extract %203[0, 0, 0] : f32 from vector<1x1x1xf32>
    %205 = vector.broadcast %204 : f32 to vector<1x1xf32>
    %c0_49 = arith.constant 0 : index
    %c0_50 = arith.constant 0 : index
    %c0_51 = arith.constant 0 : index
    %c0_52 = arith.constant 0 : index
    %206 = vector.load %arg8[%c0_49, %c0_50, %c0_51, %c0_52] : memref<1x1x1x1xf32, #tpu.memory_space<vmem>>, vector<1x1x1x1xf32>
    %207 = vector.shape_cast %206 : vector<1x1x1x1xf32> to vector<1x1xf32>
    %208 = vector.shape_cast %205 : vector<1x1xf32> to vector<1x1x1x1xf32>
    tpu.vector_store %arg8[%c0_49, %c0_50, %c0_51, %c0_52], %208 {strides = array<i32>} : memref<1x1x1x1xf32, #tpu.memory_space<vmem>>, vector<1x1x1x1xf32>,
    %209 = arith.mulf %197, %197 : vector<8x8xf32>
    %210 = vector.shape_cast %209 : vector<8x8xf32> to vector<1x8x8xf32>
    %cst_53 = arith.constant dense<0.000000e+00> : vector<1xf32>
    %211 = vector.multi_reduction <add>, %210, %cst_53 [1, 2] : vector<1x8x8xf32> to vector<1xf32>
    %212 = vector.shape_cast %211 : vector<1xf32> to vector<1x1x1xf32>
    %213 = vector.extract %212[0, 0, 0] : f32 from vector<1x1x1xf32>
    %214 = vector.broadcast %213 : f32 to vector<1x1xf32>
    %c0_54 = arith.constant 0 : index
    %c0_55 = arith.constant 0 : index
    %c0_56 = arith.constant 0 : index
    %c0_57 = arith.constant 0 : index
    %215 = vector.load %arg9[%c0_54, %c0_55, %c0_56, %c0_57] : memref<1x1x1x1xf32, #tpu.memory_space<vmem>>, vector<1x1x1x1xf32>
    %216 = vector.shape_cast %215 : vector<1x1x1x1xf32> to vector<1x1xf32>
    %217 = vector.shape_cast %214 : vector<1x1xf32> to vector<1x1x1x1xf32>
    tpu.vector_store %arg9[%c0_54, %c0_55, %c0_56, %c0_57], %217 {strides = array<i32>} : memref<1x1x1x1xf32, #tpu.memory_space<vmem>>, vector<1x1x1x1xf32>,
    return
  }
  func.func @transform_0(%arg0: i32, %arg1: i32) -> (i32, i32, i32, i32) {
    %c0_i32 = arith.constant 0 : i32
    %c0_i32_0 = arith.constant 0 : i32
    %c0_i32_1 = arith.constant 0 : i32
    return %arg0, %arg1, %c0_i32, %c0_i32_0 : i32, i32, i32, i32
  }
  func.func @transform_1(%arg0: i32, %arg1: i32) -> (i32, i32, i32, i32) {
    %c0_i32 = arith.constant 0 : i32
    %c0_i32_0 = arith.constant 0 : i32
    %c0_i32_1 = arith.constant 0 : i32
    return %arg0, %arg1, %c0_i32, %c0_i32_0 : i32, i32, i32, i32
  }
  func.func @transform_2(%arg0: i32, %arg1: i32) -> (i32, i32, i32, i32) {
    %c0_i32 = arith.constant 0 : i32
    %c0_i32_0 = arith.constant 0 : i32
    %c0_i32_1 = arith.constant 0 : i32
    return %arg0, %arg1, %c0_i32, %c0_i32_0 : i32, i32, i32, i32
  }
  func.func @transform_3(%arg0: i32, %arg1: i32) -> (i32, i32, i32, i32) {
    %c0_i32 = arith.constant 0 : i32
    %c0_i32_0 = arith.constant 0 : i32
    %c0_i32_1 = arith.constant 0 : i32
    return %arg0, %arg1, %c0_i32, %c0_i32_0 : i32, i32, i32, i32
  }
  func.func @transform_4(%arg0: i32, %arg1: i32) -> (i32, i32, i32) {
    %c0_i32 = arith.constant 0 : i32
    %c0_i32_0 = arith.constant 0 : i32
    %c0_i32_1 = arith.constant 0 : i32
    return %arg1, %c0_i32, %c0_i32_0 : i32, i32, i32
  }
  func.func @transform_5(%arg0: i32, %arg1: i32) -> (i32, i32, i32, i32) {
    %c0_i32 = arith.constant 0 : i32
    %c0_i32_0 = arith.constant 0 : i32
    %c0_i32_1 = arith.constant 0 : i32
    return %arg0, %arg1, %c0_i32, %c0_i32_0 : i32, i32, i32, i32
  }
  func.func @transform_6(%arg0: i32, %arg1: i32) -> (i32, i32, i32, i32) {
    %c0_i32 = arith.constant 0 : i32
    %c0_i32_0 = arith.constant 0 : i32
    %c0_i32_1 = arith.constant 0 : i32
    return %arg0, %arg1, %c0_i32, %c0_i32_0 : i32, i32, i32, i32
  }
  func.func @transform_7(%arg0: i32, %arg1: i32) -> (i32, i32, i32, i32) {
    %c0_i32 = arith.constant 0 : i32
    %c0_i32_0 = arith.constant 0 : i32
    %c0_i32_1 = arith.constant 0 : i32
    return %arg0, %arg1, %c0_i32, %c0_i32_0 : i32, i32, i32, i32
  }
}

module attributes {stable_mosaic.version = 11 : i64} {
  func.func @dhfe_pass2_kernel(%arg0: i32, %arg1: i32, %arg2: memref<1x4x8x8xf32, #tpu.memory_space<vmem>>, %arg3: memref<1x4xf32, #tpu.memory_space<vmem>>, %arg4: memref<1x4xf32, #tpu.memory_space<vmem>>, %arg5: memref<8x4xf32, #tpu.memory_space<vmem>>, %arg6: memref<1x8xf32, #tpu.memory_space<vmem>>, %arg7: memref<1x8x8x8xf32, #tpu.memory_space<vmem>>) attributes {dimension_semantics = [#tpu.dimension_semantics<parallel>, #tpu.dimension_semantics<parallel>], iteration_bounds = array<i64: 2, 1>, scalar_prefetch = 0 : i64, scratch_operands = 0 : i64, tpu.core_type = #tpu.core_type<tc>, window_params = [{transform_indices = @transform_0, window_bounds = array<i64: 1, 4, 8, 8>}, {pipeline_mode = #tpu.pipeline_mode<synchronous>, transform_indices = @transform_1, window_bounds = array<i64: 1, 4>}, {pipeline_mode = #tpu.pipeline_mode<synchronous>, transform_indices = @transform_2, window_bounds = array<i64: 1, 4>}, {pipeline_mode = #tpu.pipeline_mode<synchronous>, transform_indices = @transform_3, window_bounds = array<i64: 8, 4>}, {pipeline_mode = #tpu.pipeline_mode<synchronous>, transform_indices = @transform_4, window_bounds = array<i64: 1, 8>}, {transform_indices = @transform_5, window_bounds = array<i64: 1, 8, 8, 8>}]} {
    %c0 = arith.constant 0 : index
    %c0_0 = arith.constant 0 : index
    %c0_1 = arith.constant 0 : index
    %c0_2 = arith.constant 0 : index
    %0 = vector.load %arg2[%c0, %c0_0, %c0_1, %c0_2] : memref<1x4x8x8xf32, #tpu.memory_space<vmem>>, vector<1x1x8x8xf32>
    %1 = vector.shape_cast %0 : vector<1x1x8x8xf32> to vector<8x8xf32>
    %c0_3 = arith.constant 0 : index
    %c0_4 = arith.constant 0 : index
    %2 = vector.load %arg3[%c0_3, %c0_4] : memref<1x4xf32, #tpu.memory_space<vmem>>, vector<1x1xf32>
    %3 = vector.broadcast %2 : vector<1x1xf32> to vector<8x8xf32>
    %4 = arith.mulf %1, %3 : vector<8x8xf32>
    %c0_5 = arith.constant 0 : index
    %c0_6 = arith.constant 0 : index
    %5 = vector.load %arg4[%c0_5, %c0_6] : memref<1x4xf32, #tpu.memory_space<vmem>>, vector<1x1xf32>
    %6 = vector.broadcast %5 : vector<1x1xf32> to vector<8x8xf32>
    %7 = arith.addf %4, %6 : vector<8x8xf32>
    %cst = arith.constant 0.000000e+00 : f32
    %8 = vector.broadcast %cst : f32 to vector<8x8xf32>
    %9 = arith.maximumf %7, %8 : vector<8x8xf32>
    %c0_7 = arith.constant 0 : index
    %c1 = arith.constant 1 : index
    %c0_8 = arith.constant 0 : index
    %c0_9 = arith.constant 0 : index
    %10 = vector.load %arg2[%c0_7, %c1, %c0_8, %c0_9] : memref<1x4x8x8xf32, #tpu.memory_space<vmem>>, vector<1x1x8x8xf32>
    %11 = vector.shape_cast %10 : vector<1x1x8x8xf32> to vector<8x8xf32>
    %c0_10 = arith.constant 0 : index
    %c1_11 = arith.constant 1 : index
    %12 = vector.load %arg3[%c0_10, %c1_11] : memref<1x4xf32, #tpu.memory_space<vmem>>, vector<1x1xf32>
    %13 = vector.broadcast %12 : vector<1x1xf32> to vector<8x8xf32>
    %14 = arith.mulf %11, %13 : vector<8x8xf32>
    %c0_12 = arith.constant 0 : index
    %c1_13 = arith.constant 1 : index
    %15 = vector.load %arg4[%c0_12, %c1_13] : memref<1x4xf32, #tpu.memory_space<vmem>>, vector<1x1xf32>
    %16 = vector.broadcast %15 : vector<1x1xf32> to vector<8x8xf32>
    %17 = arith.addf %14, %16 : vector<8x8xf32>
    %cst_14 = arith.constant 0.000000e+00 : f32
    %18 = vector.broadcast %cst_14 : f32 to vector<8x8xf32>
    %19 = arith.maximumf %17, %18 : vector<8x8xf32>
    %c0_15 = arith.constant 0 : index
    %c2 = arith.constant 2 : index
    %c0_16 = arith.constant 0 : index
    %c0_17 = arith.constant 0 : index
    %20 = vector.load %arg2[%c0_15, %c2, %c0_16, %c0_17] : memref<1x4x8x8xf32, #tpu.memory_space<vmem>>, vector<1x1x8x8xf32>
    %21 = vector.shape_cast %20 : vector<1x1x8x8xf32> to vector<8x8xf32>
    %c0_18 = arith.constant 0 : index
    %c2_19 = arith.constant 2 : index
    %22 = vector.load %arg3[%c0_18, %c2_19] : memref<1x4xf32, #tpu.memory_space<vmem>>, vector<1x1xf32>
    %23 = vector.broadcast %22 : vector<1x1xf32> to vector<8x8xf32>
    %24 = arith.mulf %21, %23 : vector<8x8xf32>
    %c0_20 = arith.constant 0 : index
    %c2_21 = arith.constant 2 : index
    %25 = vector.load %arg4[%c0_20, %c2_21] : memref<1x4xf32, #tpu.memory_space<vmem>>, vector<1x1xf32>
    %26 = vector.broadcast %25 : vector<1x1xf32> to vector<8x8xf32>
    %27 = arith.addf %24, %26 : vector<8x8xf32>
    %cst_22 = arith.constant 0.000000e+00 : f32
    %28 = vector.broadcast %cst_22 : f32 to vector<8x8xf32>
    %29 = arith.maximumf %27, %28 : vector<8x8xf32>
    %c0_23 = arith.constant 0 : index
    %c3 = arith.constant 3 : index
    %c0_24 = arith.constant 0 : index
    %c0_25 = arith.constant 0 : index
    %30 = vector.load %arg2[%c0_23, %c3, %c0_24, %c0_25] : memref<1x4x8x8xf32, #tpu.memory_space<vmem>>, vector<1x1x8x8xf32>
    %31 = vector.shape_cast %30 : vector<1x1x8x8xf32> to vector<8x8xf32>
    %c0_26 = arith.constant 0 : index
    %c3_27 = arith.constant 3 : index
    %32 = vector.load %arg3[%c0_26, %c3_27] : memref<1x4xf32, #tpu.memory_space<vmem>>, vector<1x1xf32>
    %33 = vector.broadcast %32 : vector<1x1xf32> to vector<8x8xf32>
    %34 = arith.mulf %31, %33 : vector<8x8xf32>
    %c0_28 = arith.constant 0 : index
    %c3_29 = arith.constant 3 : index
    %35 = vector.load %arg4[%c0_28, %c3_29] : memref<1x4xf32, #tpu.memory_space<vmem>>, vector<1x1xf32>
    %36 = vector.broadcast %35 : vector<1x1xf32> to vector<8x8xf32>
    %37 = arith.addf %34, %36 : vector<8x8xf32>
    %cst_30 = arith.constant 0.000000e+00 : f32
    %38 = vector.broadcast %cst_30 : f32 to vector<8x8xf32>
    %39 = arith.maximumf %37, %38 : vector<8x8xf32>
    %cst_31 = arith.constant 0.000000e+00 : f32
    %40 = vector.broadcast %cst_31 : f32 to vector<8x8xf32>
    %c0_32 = arith.constant 0 : index
    %c0_33 = arith.constant 0 : index
    %41 = vector.load %arg5[%c0_32, %c0_33] : memref<8x4xf32, #tpu.memory_space<vmem>>, vector<1x1xf32>
    %42 = vector.broadcast %41 : vector<1x1xf32> to vector<8x8xf32>
    %43 = arith.mulf %9, %42 : vector<8x8xf32>
    %44 = arith.addf %40, %43 : vector<8x8xf32>
    %c0_34 = arith.constant 0 : index
    %c1_35 = arith.constant 1 : index
    %45 = vector.load %arg5[%c0_34, %c1_35] : memref<8x4xf32, #tpu.memory_space<vmem>>, vector<1x1xf32>
    %46 = vector.broadcast %45 : vector<1x1xf32> to vector<8x8xf32>
    %47 = arith.mulf %19, %46 : vector<8x8xf32>
    %48 = arith.addf %44, %47 : vector<8x8xf32>
    %c0_36 = arith.constant 0 : index
    %c2_37 = arith.constant 2 : index
    %49 = vector.load %arg5[%c0_36, %c2_37] : memref<8x4xf32, #tpu.memory_space<vmem>>, vector<1x1xf32>
    %50 = vector.broadcast %49 : vector<1x1xf32> to vector<8x8xf32>
    %51 = arith.mulf %29, %50 : vector<8x8xf32>
    %52 = arith.addf %48, %51 : vector<8x8xf32>
    %c0_38 = arith.constant 0 : index
    %c3_39 = arith.constant 3 : index
    %53 = vector.load %arg5[%c0_38, %c3_39] : memref<8x4xf32, #tpu.memory_space<vmem>>, vector<1x1xf32>
    %54 = vector.broadcast %53 : vector<1x1xf32> to vector<8x8xf32>
    %55 = arith.mulf %39, %54 : vector<8x8xf32>
    %56 = arith.addf %52, %55 : vector<8x8xf32>
    %c0_40 = arith.constant 0 : index
    %c0_41 = arith.constant 0 : index
    %57 = vector.load %arg6[%c0_40, %c0_41] : memref<1x8xf32, #tpu.memory_space<vmem>>, vector<1x1xf32>
    %58 = vector.broadcast %57 : vector<1x1xf32> to vector<8x8xf32>
    %59 = arith.addf %56, %58 : vector<8x8xf32>
    %cst_42 = arith.constant 0.000000e+00 : f32
    %60 = vector.broadcast %cst_42 : f32 to vector<8x8xf32>
    %61 = arith.subf %60, %59 : vector<8x8xf32>
    %62 = math.exp %61 : vector<8x8xf32>
    %cst_43 = arith.constant 1.000000e+00 : f32
    %63 = vector.broadcast %cst_43 : f32 to vector<8x8xf32>
    %64 = arith.addf %63, %62 : vector<8x8xf32>
    %65 = tpu.reciprocal %64 : vector<8x8xf32> -> vector<8x8xf32>
    %c0_44 = arith.constant 0 : index
    %c0_45 = arith.constant 0 : index
    %c0_46 = arith.constant 0 : index
    %c0_47 = arith.constant 0 : index
    %66 = vector.load %arg7[%c0_44, %c0_45, %c0_46, %c0_47] : memref<1x8x8x8xf32, #tpu.memory_space<vmem>>, vector<1x1x8x8xf32>
    %67 = vector.shape_cast %66 : vector<1x1x8x8xf32> to vector<8x8xf32>
    %68 = vector.shape_cast %65 : vector<8x8xf32> to vector<1x1x8x8xf32>
    tpu.vector_store %arg7[%c0_44, %c0_45, %c0_46, %c0_47], %68 {strides = array<i32>} : memref<1x8x8x8xf32, #tpu.memory_space<vmem>>, vector<1x1x8x8xf32>,
    %cst_48 = arith.constant 0.000000e+00 : f32
    %69 = vector.broadcast %cst_48 : f32 to vector<8x8xf32>
    %c1_49 = arith.constant 1 : index
    %c0_50 = arith.constant 0 : index
    %70 = vector.load %arg5[%c1_49, %c0_50] : memref<8x4xf32, #tpu.memory_space<vmem>>, vector<1x1xf32>
    %71 = vector.broadcast %70 : vector<1x1xf32> to vector<8x8xf32>
    %72 = arith.mulf %9, %71 : vector<8x8xf32>
    %73 = arith.addf %69, %72 : vector<8x8xf32>
    %c1_51 = arith.constant 1 : index
    %c1_52 = arith.constant 1 : index
    %74 = vector.load %arg5[%c1_51, %c1_52] : memref<8x4xf32, #tpu.memory_space<vmem>>, vector<1x1xf32>
    %75 = vector.broadcast %74 : vector<1x1xf32> to vector<8x8xf32>
    %76 = arith.mulf %19, %75 : vector<8x8xf32>
    %77 = arith.addf %73, %76 : vector<8x8xf32>
    %c1_53 = arith.constant 1 : index
    %c2_54 = arith.constant 2 : index
    %78 = vector.load %arg5[%c1_53, %c2_54] : memref<8x4xf32, #tpu.memory_space<vmem>>, vector<1x1xf32>
    %79 = vector.broadcast %78 : vector<1x1xf32> to vector<8x8xf32>
    %80 = arith.mulf %29, %79 : vector<8x8xf32>
    %81 = arith.addf %77, %80 : vector<8x8xf32>
    %c1_55 = arith.constant 1 : index
    %c3_56 = arith.constant 3 : index
    %82 = vector.load %arg5[%c1_55, %c3_56] : memref<8x4xf32, #tpu.memory_space<vmem>>, vector<1x1xf32>
    %83 = vector.broadcast %82 : vector<1x1xf32> to vector<8x8xf32>
    %84 = arith.mulf %39, %83 : vector<8x8xf32>
    %85 = arith.addf %81, %84 : vector<8x8xf32>
    %c0_57 = arith.constant 0 : index
    %c1_58 = arith.constant 1 : index
    %86 = vector.load %arg6[%c0_57, %c1_58] : memref<1x8xf32, #tpu.memory_space<vmem>>, vector<1x1xf32>
    %87 = vector.broadcast %86 : vector<1x1xf32> to vector<8x8xf32>
    %88 = arith.addf %85, %87 : vector<8x8xf32>
    %cst_59 = arith.constant 0.000000e+00 : f32
    %89 = vector.broadcast %cst_59 : f32 to vector<8x8xf32>
    %90 = arith.subf %89, %88 : vector<8x8xf32>
    %91 = math.exp %90 : vector<8x8xf32>
    %cst_60 = arith.constant 1.000000e+00 : f32
    %92 = vector.broadcast %cst_60 : f32 to vector<8x8xf32>
    %93 = arith.addf %92, %91 : vector<8x8xf32>
    %94 = tpu.reciprocal %93 : vector<8x8xf32> -> vector<8x8xf32>
    %c0_61 = arith.constant 0 : index
    %c1_62 = arith.constant 1 : index
    %c0_63 = arith.constant 0 : index
    %c0_64 = arith.constant 0 : index
    %95 = vector.load %arg7[%c0_61, %c1_62, %c0_63, %c0_64] : memref<1x8x8x8xf32, #tpu.memory_space<vmem>>, vector<1x1x8x8xf32>
    %96 = vector.shape_cast %95 : vector<1x1x8x8xf32> to vector<8x8xf32>
    %97 = vector.shape_cast %94 : vector<8x8xf32> to vector<1x1x8x8xf32>
    tpu.vector_store %arg7[%c0_61, %c1_62, %c0_63, %c0_64], %97 {strides = array<i32>} : memref<1x8x8x8xf32, #tpu.memory_space<vmem>>, vector<1x1x8x8xf32>,
    %cst_65 = arith.constant 0.000000e+00 : f32
    %98 = vector.broadcast %cst_65 : f32 to vector<8x8xf32>
    %c2_66 = arith.constant 2 : index
    %c0_67 = arith.constant 0 : index
    %99 = vector.load %arg5[%c2_66, %c0_67] : memref<8x4xf32, #tpu.memory_space<vmem>>, vector<1x1xf32>
    %100 = vector.broadcast %99 : vector<1x1xf32> to vector<8x8xf32>
    %101 = arith.mulf %9, %100 : vector<8x8xf32>
    %102 = arith.addf %98, %101 : vector<8x8xf32>
    %c2_68 = arith.constant 2 : index
    %c1_69 = arith.constant 1 : index
    %103 = vector.load %arg5[%c2_68, %c1_69] : memref<8x4xf32, #tpu.memory_space<vmem>>, vector<1x1xf32>
    %104 = vector.broadcast %103 : vector<1x1xf32> to vector<8x8xf32>
    %105 = arith.mulf %19, %104 : vector<8x8xf32>
    %106 = arith.addf %102, %105 : vector<8x8xf32>
    %c2_70 = arith.constant 2 : index
    %c2_71 = arith.constant 2 : index
    %107 = vector.load %arg5[%c2_70, %c2_71] : memref<8x4xf32, #tpu.memory_space<vmem>>, vector<1x1xf32>
    %108 = vector.broadcast %107 : vector<1x1xf32> to vector<8x8xf32>
    %109 = arith.mulf %29, %108 : vector<8x8xf32>
    %110 = arith.addf %106, %109 : vector<8x8xf32>
    %c2_72 = arith.constant 2 : index
    %c3_73 = arith.constant 3 : index
    %111 = vector.load %arg5[%c2_72, %c3_73] : memref<8x4xf32, #tpu.memory_space<vmem>>, vector<1x1xf32>
    %112 = vector.broadcast %111 : vector<1x1xf32> to vector<8x8xf32>
    %113 = arith.mulf %39, %112 : vector<8x8xf32>
    %114 = arith.addf %110, %113 : vector<8x8xf32>
    %c0_74 = arith.constant 0 : index
    %c2_75 = arith.constant 2 : index
    %115 = vector.load %arg6[%c0_74, %c2_75] : memref<1x8xf32, #tpu.memory_space<vmem>>, vector<1x1xf32>
    %116 = vector.broadcast %115 : vector<1x1xf32> to vector<8x8xf32>
    %117 = arith.addf %114, %116 : vector<8x8xf32>
    %cst_76 = arith.constant 0.000000e+00 : f32
    %118 = vector.broadcast %cst_76 : f32 to vector<8x8xf32>
    %119 = arith.subf %118, %117 : vector<8x8xf32>
    %120 = math.exp %119 : vector<8x8xf32>
    %cst_77 = arith.constant 1.000000e+00 : f32
    %121 = vector.broadcast %cst_77 : f32 to vector<8x8xf32>
    %122 = arith.addf %121, %120 : vector<8x8xf32>
    %123 = tpu.reciprocal %122 : vector<8x8xf32> -> vector<8x8xf32>
    %c0_78 = arith.constant 0 : index
    %c2_79 = arith.constant 2 : index
    %c0_80 = arith.constant 0 : index
    %c0_81 = arith.constant 0 : index
    %124 = vector.load %arg7[%c0_78, %c2_79, %c0_80, %c0_81] : memref<1x8x8x8xf32, #tpu.memory_space<vmem>>, vector<1x1x8x8xf32>
    %125 = vector.shape_cast %124 : vector<1x1x8x8xf32> to vector<8x8xf32>
    %126 = vector.shape_cast %123 : vector<8x8xf32> to vector<1x1x8x8xf32>
    tpu.vector_store %arg7[%c0_78, %c2_79, %c0_80, %c0_81], %126 {strides = array<i32>} : memref<1x8x8x8xf32, #tpu.memory_space<vmem>>, vector<1x1x8x8xf32>,
    %cst_82 = arith.constant 0.000000e+00 : f32
    %127 = vector.broadcast %cst_82 : f32 to vector<8x8xf32>
    %c3_83 = arith.constant 3 : index
    %c0_84 = arith.constant 0 : index
    %128 = vector.load %arg5[%c3_83, %c0_84] : memref<8x4xf32, #tpu.memory_space<vmem>>, vector<1x1xf32>
    %129 = vector.broadcast %128 : vector<1x1xf32> to vector<8x8xf32>
    %130 = arith.mulf %9, %129 : vector<8x8xf32>
    %131 = arith.addf %127, %130 : vector<8x8xf32>
    %c3_85 = arith.constant 3 : index
    %c1_86 = arith.constant 1 : index
    %132 = vector.load %arg5[%c3_85, %c1_86] : memref<8x4xf32, #tpu.memory_space<vmem>>, vector<1x1xf32>
    %133 = vector.broadcast %132 : vector<1x1xf32> to vector<8x8xf32>
    %134 = arith.mulf %19, %133 : vector<8x8xf32>
    %135 = arith.addf %131, %134 : vector<8x8xf32>
    %c3_87 = arith.constant 3 : index
    %c2_88 = arith.constant 2 : index
    %136 = vector.load %arg5[%c3_87, %c2_88] : memref<8x4xf32, #tpu.memory_space<vmem>>, vector<1x1xf32>
    %137 = vector.broadcast %136 : vector<1x1xf32> to vector<8x8xf32>
    %138 = arith.mulf %29, %137 : vector<8x8xf32>
    %139 = arith.addf %135, %138 : vector<8x8xf32>
    %c3_89 = arith.constant 3 : index
    %c3_90 = arith.constant 3 : index
    %140 = vector.load %arg5[%c3_89, %c3_90] : memref<8x4xf32, #tpu.memory_space<vmem>>, vector<1x1xf32>
    %141 = vector.broadcast %140 : vector<1x1xf32> to vector<8x8xf32>
    %142 = arith.mulf %39, %141 : vector<8x8xf32>
    %143 = arith.addf %139, %142 : vector<8x8xf32>
    %c0_91 = arith.constant 0 : index
    %c3_92 = arith.constant 3 : index
    %144 = vector.load %arg6[%c0_91, %c3_92] : memref<1x8xf32, #tpu.memory_space<vmem>>, vector<1x1xf32>
    %145 = vector.broadcast %144 : vector<1x1xf32> to vector<8x8xf32>
    %146 = arith.addf %143, %145 : vector<8x8xf32>
    %cst_93 = arith.constant 0.000000e+00 : f32
    %147 = vector.broadcast %cst_93 : f32 to vector<8x8xf32>
    %148 = arith.subf %147, %146 : vector<8x8xf32>
    %149 = math.exp %148 : vector<8x8xf32>
    %cst_94 = arith.constant 1.000000e+00 : f32
    %150 = vector.broadcast %cst_94 : f32 to vector<8x8xf32>
    %151 = arith.addf %150, %149 : vector<8x8xf32>
    %152 = tpu.reciprocal %151 : vector<8x8xf32> -> vector<8x8xf32>
    %c0_95 = arith.constant 0 : index
    %c3_96 = arith.constant 3 : index
    %c0_97 = arith.constant 0 : index
    %c0_98 = arith.constant 0 : index
    %153 = vector.load %arg7[%c0_95, %c3_96, %c0_97, %c0_98] : memref<1x8x8x8xf32, #tpu.memory_space<vmem>>, vector<1x1x8x8xf32>
    %154 = vector.shape_cast %153 : vector<1x1x8x8xf32> to vector<8x8xf32>
    %155 = vector.shape_cast %152 : vector<8x8xf32> to vector<1x1x8x8xf32>
    tpu.vector_store %arg7[%c0_95, %c3_96, %c0_97, %c0_98], %155 {strides = array<i32>} : memref<1x8x8x8xf32, #tpu.memory_space<vmem>>, vector<1x1x8x8xf32>,
    %cst_99 = arith.constant 0.000000e+00 : f32
    %156 = vector.broadcast %cst_99 : f32 to vector<8x8xf32>
    %c4 = arith.constant 4 : index
    %c0_100 = arith.constant 0 : index
    %157 = vector.load %arg5[%c4, %c0_100] : memref<8x4xf32, #tpu.memory_space<vmem>>, vector<1x1xf32>
    %158 = vector.broadcast %157 : vector<1x1xf32> to vector<8x8xf32>
    %159 = arith.mulf %9, %158 : vector<8x8xf32>
    %160 = arith.addf %156, %159 : vector<8x8xf32>
    %c4_101 = arith.constant 4 : index
    %c1_102 = arith.constant 1 : index
    %161 = vector.load %arg5[%c4_101, %c1_102] : memref<8x4xf32, #tpu.memory_space<vmem>>, vector<1x1xf32>
    %162 = vector.broadcast %161 : vector<1x1xf32> to vector<8x8xf32>
    %163 = arith.mulf %19, %162 : vector<8x8xf32>
    %164 = arith.addf %160, %163 : vector<8x8xf32>
    %c4_103 = arith.constant 4 : index
    %c2_104 = arith.constant 2 : index
    %165 = vector.load %arg5[%c4_103, %c2_104] : memref<8x4xf32, #tpu.memory_space<vmem>>, vector<1x1xf32>
    %166 = vector.broadcast %165 : vector<1x1xf32> to vector<8x8xf32>
    %167 = arith.mulf %29, %166 : vector<8x8xf32>
    %168 = arith.addf %164, %167 : vector<8x8xf32>
    %c4_105 = arith.constant 4 : index
    %c3_106 = arith.constant 3 : index
    %169 = vector.load %arg5[%c4_105, %c3_106] : memref<8x4xf32, #tpu.memory_space<vmem>>, vector<1x1xf32>
    %170 = vector.broadcast %169 : vector<1x1xf32> to vector<8x8xf32>
    %171 = arith.mulf %39, %170 : vector<8x8xf32>
    %172 = arith.addf %168, %171 : vector<8x8xf32>
    %c0_107 = arith.constant 0 : index
    %c4_108 = arith.constant 4 : index
    %173 = vector.load %arg6[%c0_107, %c4_108] : memref<1x8xf32, #tpu.memory_space<vmem>>, vector<1x1xf32>
    %174 = vector.broadcast %173 : vector<1x1xf32> to vector<8x8xf32>
    %175 = arith.addf %172, %174 : vector<8x8xf32>
    %cst_109 = arith.constant 0.000000e+00 : f32
    %176 = vector.broadcast %cst_109 : f32 to vector<8x8xf32>
    %177 = arith.subf %176, %175 : vector<8x8xf32>
    %178 = math.exp %177 : vector<8x8xf32>
    %cst_110 = arith.constant 1.000000e+00 : f32
    %179 = vector.broadcast %cst_110 : f32 to vector<8x8xf32>
    %180 = arith.addf %179, %178 : vector<8x8xf32>
    %181 = tpu.reciprocal %180 : vector<8x8xf32> -> vector<8x8xf32>
    %c0_111 = arith.constant 0 : index
    %c4_112 = arith.constant 4 : index
    %c0_113 = arith.constant 0 : index
    %c0_114 = arith.constant 0 : index
    %182 = vector.load %arg7[%c0_111, %c4_112, %c0_113, %c0_114] : memref<1x8x8x8xf32, #tpu.memory_space<vmem>>, vector<1x1x8x8xf32>
    %183 = vector.shape_cast %182 : vector<1x1x8x8xf32> to vector<8x8xf32>
    %184 = vector.shape_cast %181 : vector<8x8xf32> to vector<1x1x8x8xf32>
    tpu.vector_store %arg7[%c0_111, %c4_112, %c0_113, %c0_114], %184 {strides = array<i32>} : memref<1x8x8x8xf32, #tpu.memory_space<vmem>>, vector<1x1x8x8xf32>,
    %cst_115 = arith.constant 0.000000e+00 : f32
    %185 = vector.broadcast %cst_115 : f32 to vector<8x8xf32>
    %c5 = arith.constant 5 : index
    %c0_116 = arith.constant 0 : index
    %186 = vector.load %arg5[%c5, %c0_116] : memref<8x4xf32, #tpu.memory_space<vmem>>, vector<1x1xf32>
    %187 = vector.broadcast %186 : vector<1x1xf32> to vector<8x8xf32>
    %188 = arith.mulf %9, %187 : vector<8x8xf32>
    %189 = arith.addf %185, %188 : vector<8x8xf32>
    %c5_117 = arith.constant 5 : index
    %c1_118 = arith.constant 1 : index
    %190 = vector.load %arg5[%c5_117, %c1_118] : memref<8x4xf32, #tpu.memory_space<vmem>>, vector<1x1xf32>
    %191 = vector.broadcast %190 : vector<1x1xf32> to vector<8x8xf32>
    %192 = arith.mulf %19, %191 : vector<8x8xf32>
    %193 = arith.addf %189, %192 : vector<8x8xf32>
    %c5_119 = arith.constant 5 : index
    %c2_120 = arith.constant 2 : index
    %194 = vector.load %arg5[%c5_119, %c2_120] : memref<8x4xf32, #tpu.memory_space<vmem>>, vector<1x1xf32>
    %195 = vector.broadcast %194 : vector<1x1xf32> to vector<8x8xf32>
    %196 = arith.mulf %29, %195 : vector<8x8xf32>
    %197 = arith.addf %193, %196 : vector<8x8xf32>
    %c5_121 = arith.constant 5 : index
    %c3_122 = arith.constant 3 : index
    %198 = vector.load %arg5[%c5_121, %c3_122] : memref<8x4xf32, #tpu.memory_space<vmem>>, vector<1x1xf32>
    %199 = vector.broadcast %198 : vector<1x1xf32> to vector<8x8xf32>
    %200 = arith.mulf %39, %199 : vector<8x8xf32>
    %201 = arith.addf %197, %200 : vector<8x8xf32>
    %c0_123 = arith.constant 0 : index
    %c5_124 = arith.constant 5 : index
    %202 = vector.load %arg6[%c0_123, %c5_124] : memref<1x8xf32, #tpu.memory_space<vmem>>, vector<1x1xf32>
    %203 = vector.broadcast %202 : vector<1x1xf32> to vector<8x8xf32>
    %204 = arith.addf %201, %203 : vector<8x8xf32>
    %cst_125 = arith.constant 0.000000e+00 : f32
    %205 = vector.broadcast %cst_125 : f32 to vector<8x8xf32>
    %206 = arith.subf %205, %204 : vector<8x8xf32>
    %207 = math.exp %206 : vector<8x8xf32>
    %cst_126 = arith.constant 1.000000e+00 : f32
    %208 = vector.broadcast %cst_126 : f32 to vector<8x8xf32>
    %209 = arith.addf %208, %207 : vector<8x8xf32>
    %210 = tpu.reciprocal %209 : vector<8x8xf32> -> vector<8x8xf32>
    %c0_127 = arith.constant 0 : index
    %c5_128 = arith.constant 5 : index
    %c0_129 = arith.constant 0 : index
    %c0_130 = arith.constant 0 : index
    %211 = vector.load %arg7[%c0_127, %c5_128, %c0_129, %c0_130] : memref<1x8x8x8xf32, #tpu.memory_space<vmem>>, vector<1x1x8x8xf32>
    %212 = vector.shape_cast %211 : vector<1x1x8x8xf32> to vector<8x8xf32>
    %213 = vector.shape_cast %210 : vector<8x8xf32> to vector<1x1x8x8xf32>
    tpu.vector_store %arg7[%c0_127, %c5_128, %c0_129, %c0_130], %213 {strides = array<i32>} : memref<1x8x8x8xf32, #tpu.memory_space<vmem>>, vector<1x1x8x8xf32>,
    %cst_131 = arith.constant 0.000000e+00 : f32
    %214 = vector.broadcast %cst_131 : f32 to vector<8x8xf32>
    %c6 = arith.constant 6 : index
    %c0_132 = arith.constant 0 : index
    %215 = vector.load %arg5[%c6, %c0_132] : memref<8x4xf32, #tpu.memory_space<vmem>>, vector<1x1xf32>
    %216 = vector.broadcast %215 : vector<1x1xf32> to vector<8x8xf32>
    %217 = arith.mulf %9, %216 : vector<8x8xf32>
    %218 = arith.addf %214, %217 : vector<8x8xf32>
    %c6_133 = arith.constant 6 : index
    %c1_134 = arith.constant 1 : index
    %219 = vector.load %arg5[%c6_133, %c1_134] : memref<8x4xf32, #tpu.memory_space<vmem>>, vector<1x1xf32>
    %220 = vector.broadcast %219 : vector<1x1xf32> to vector<8x8xf32>
    %221 = arith.mulf %19, %220 : vector<8x8xf32>
    %222 = arith.addf %218, %221 : vector<8x8xf32>
    %c6_135 = arith.constant 6 : index
    %c2_136 = arith.constant 2 : index
    %223 = vector.load %arg5[%c6_135, %c2_136] : memref<8x4xf32, #tpu.memory_space<vmem>>, vector<1x1xf32>
    %224 = vector.broadcast %223 : vector<1x1xf32> to vector<8x8xf32>
    %225 = arith.mulf %29, %224 : vector<8x8xf32>
    %226 = arith.addf %222, %225 : vector<8x8xf32>
    %c6_137 = arith.constant 6 : index
    %c3_138 = arith.constant 3 : index
    %227 = vector.load %arg5[%c6_137, %c3_138] : memref<8x4xf32, #tpu.memory_space<vmem>>, vector<1x1xf32>
    %228 = vector.broadcast %227 : vector<1x1xf32> to vector<8x8xf32>
    %229 = arith.mulf %39, %228 : vector<8x8xf32>
    %230 = arith.addf %226, %229 : vector<8x8xf32>
    %c0_139 = arith.constant 0 : index
    %c6_140 = arith.constant 6 : index
    %231 = vector.load %arg6[%c0_139, %c6_140] : memref<1x8xf32, #tpu.memory_space<vmem>>, vector<1x1xf32>
    %232 = vector.broadcast %231 : vector<1x1xf32> to vector<8x8xf32>
    %233 = arith.addf %230, %232 : vector<8x8xf32>
    %cst_141 = arith.constant 0.000000e+00 : f32
    %234 = vector.broadcast %cst_141 : f32 to vector<8x8xf32>
    %235 = arith.subf %234, %233 : vector<8x8xf32>
    %236 = math.exp %235 : vector<8x8xf32>
    %cst_142 = arith.constant 1.000000e+00 : f32
    %237 = vector.broadcast %cst_142 : f32 to vector<8x8xf32>
    %238 = arith.addf %237, %236 : vector<8x8xf32>
    %239 = tpu.reciprocal %238 : vector<8x8xf32> -> vector<8x8xf32>
    %c0_143 = arith.constant 0 : index
    %c6_144 = arith.constant 6 : index
    %c0_145 = arith.constant 0 : index
    %c0_146 = arith.constant 0 : index
    %240 = vector.load %arg7[%c0_143, %c6_144, %c0_145, %c0_146] : memref<1x8x8x8xf32, #tpu.memory_space<vmem>>, vector<1x1x8x8xf32>
    %241 = vector.shape_cast %240 : vector<1x1x8x8xf32> to vector<8x8xf32>
    %242 = vector.shape_cast %239 : vector<8x8xf32> to vector<1x1x8x8xf32>
    tpu.vector_store %arg7[%c0_143, %c6_144, %c0_145, %c0_146], %242 {strides = array<i32>} : memref<1x8x8x8xf32, #tpu.memory_space<vmem>>, vector<1x1x8x8xf32>,
    %cst_147 = arith.constant 0.000000e+00 : f32
    %243 = vector.broadcast %cst_147 : f32 to vector<8x8xf32>
    %c7 = arith.constant 7 : index
    %c0_148 = arith.constant 0 : index
    %244 = vector.load %arg5[%c7, %c0_148] : memref<8x4xf32, #tpu.memory_space<vmem>>, vector<1x1xf32>
    %245 = vector.broadcast %244 : vector<1x1xf32> to vector<8x8xf32>
    %246 = arith.mulf %9, %245 : vector<8x8xf32>
    %247 = arith.addf %243, %246 : vector<8x8xf32>
    %c7_149 = arith.constant 7 : index
    %c1_150 = arith.constant 1 : index
    %248 = vector.load %arg5[%c7_149, %c1_150] : memref<8x4xf32, #tpu.memory_space<vmem>>, vector<1x1xf32>
    %249 = vector.broadcast %248 : vector<1x1xf32> to vector<8x8xf32>
    %250 = arith.mulf %19, %249 : vector<8x8xf32>
    %251 = arith.addf %247, %250 : vector<8x8xf32>
    %c7_151 = arith.constant 7 : index
    %c2_152 = arith.constant 2 : index
    %252 = vector.load %arg5[%c7_151, %c2_152] : memref<8x4xf32, #tpu.memory_space<vmem>>, vector<1x1xf32>
    %253 = vector.broadcast %252 : vector<1x1xf32> to vector<8x8xf32>
    %254 = arith.mulf %29, %253 : vector<8x8xf32>
    %255 = arith.addf %251, %254 : vector<8x8xf32>
    %c7_153 = arith.constant 7 : index
    %c3_154 = arith.constant 3 : index
    %256 = vector.load %arg5[%c7_153, %c3_154] : memref<8x4xf32, #tpu.memory_space<vmem>>, vector<1x1xf32>
    %257 = vector.broadcast %256 : vector<1x1xf32> to vector<8x8xf32>
    %258 = arith.mulf %39, %257 : vector<8x8xf32>
    %259 = arith.addf %255, %258 : vector<8x8xf32>
    %c0_155 = arith.constant 0 : index
    %c7_156 = arith.constant 7 : index
    %260 = vector.load %arg6[%c0_155, %c7_156] : memref<1x8xf32, #tpu.memory_space<vmem>>, vector<1x1xf32>
    %261 = vector.broadcast %260 : vector<1x1xf32> to vector<8x8xf32>
    %262 = arith.addf %259, %261 : vector<8x8xf32>
    %cst_157 = arith.constant 0.000000e+00 : f32
    %263 = vector.broadcast %cst_157 : f32 to vector<8x8xf32>
    %264 = arith.subf %263, %262 : vector<8x8xf32>
    %265 = math.exp %264 : vector<8x8xf32>
    %cst_158 = arith.constant 1.000000e+00 : f32
    %266 = vector.broadcast %cst_158 : f32 to vector<8x8xf32>
    %267 = arith.addf %266, %265 : vector<8x8xf32>
    %268 = tpu.reciprocal %267 : vector<8x8xf32> -> vector<8x8xf32>
    %c0_159 = arith.constant 0 : index
    %c7_160 = arith.constant 7 : index
    %c0_161 = arith.constant 0 : index
    %c0_162 = arith.constant 0 : index
    %269 = vector.load %arg7[%c0_159, %c7_160, %c0_161, %c0_162] : memref<1x8x8x8xf32, #tpu.memory_space<vmem>>, vector<1x1x8x8xf32>
    %270 = vector.shape_cast %269 : vector<1x1x8x8xf32> to vector<8x8xf32>
    %271 = vector.shape_cast %268 : vector<8x8xf32> to vector<1x1x8x8xf32>
    tpu.vector_store %arg7[%c0_159, %c7_160, %c0_161, %c0_162], %271 {strides = array<i32>} : memref<1x8x8x8xf32, #tpu.memory_space<vmem>>, vector<1x1x8x8xf32>,
    return
  }
  func.func @transform_0(%arg0: i32, %arg1: i32) -> (i32, i32, i32, i32) {
    %c0_i32 = arith.constant 0 : i32
    %c0_i32_0 = arith.constant 0 : i32
    %c0_i32_1 = arith.constant 0 : i32
    return %arg0, %c0_i32, %arg1, %c0_i32_0 : i32, i32, i32, i32
  }
  func.func @transform_1(%arg0: i32, %arg1: i32) -> (i32, i32) {
    %c0_i32 = arith.constant 0 : i32
    %c0_i32_0 = arith.constant 0 : i32
    %c0_i32_1 = arith.constant 0 : i32
    return %c0_i32, %c0_i32_0 : i32, i32
  }
  func.func @transform_2(%arg0: i32, %arg1: i32) -> (i32, i32) {
    %c0_i32 = arith.constant 0 : i32
    %c0_i32_0 = arith.constant 0 : i32
    %c0_i32_1 = arith.constant 0 : i32
    return %c0_i32, %c0_i32_0 : i32, i32
  }
  func.func @transform_3(%arg0: i32, %arg1: i32) -> (i32, i32) {
    %c0_i32 = arith.constant 0 : i32
    %c0_i32_0 = arith.constant 0 : i32
    %c0_i32_1 = arith.constant 0 : i32
    return %c0_i32, %c0_i32_0 : i32, i32
  }
  func.func @transform_4(%arg0: i32, %arg1: i32) -> (i32, i32) {
    %c0_i32 = arith.constant 0 : i32
    %c0_i32_0 = arith.constant 0 : i32
    %c0_i32_1 = arith.constant 0 : i32
    return %c0_i32, %c0_i32_0 : i32, i32
  }
  func.func @transform_5(%arg0: i32, %arg1: i32) -> (i32, i32, i32, i32) {
    %c0_i32 = arith.constant 0 : i32
    %c0_i32_0 = arith.constant 0 : i32
    %c0_i32_1 = arith.constant 0 : i32
    return %arg0, %c0_i32, %arg1, %c0_i32_0 : i32, i32, i32, i32
  }
}

</mosaic_0001>

<llo_original>
// kernel: dhfe_down_block2d.2
$region0: #{dhfe_down_block2d.2}
  #allocation0 [shape = 'u32[]', space=smem, size = 0x4, offset = 0x4, fixed_abs, tag = 'smem constant byte address 0x4 - core index']
  #allocation1 [shape = 'u32[144,128]{1,0:T(1,128)}', space=vmem, size = 0x12000, scoped, tag = 'internal scratch']
  #allocation2 [shape = 'f32[10,10]{1,0:T(8,128)}', space=vmem, size = 0x2000, scoped, tag = 'scratch operand']
  #allocation3 [shape = 'f32[10,10]{1,0:T(8,128)}', space=vmem, size = 0x2000, scoped, tag = 'scratch operand']
  %s0 = inlined_call_operand.vmem [shape: f32[2,4,9,9], index: 0, kind: input, shape index: {}]
  %s1 = inlined_call_operand.vmem [shape: f32[2,4,9,9], index: 1, kind: input, shape index: {}]
  %s2 = inlined_call_operand.vmem [shape: f32[2,4,9,9], index: 2, kind: input, shape index: {}]
  %s3 = inlined_call_operand.vmem [shape: f32[2,4,9,9], index: 3, kind: input, shape index: {}]
  %s4 = inlined_call_operand.vmem [shape: f32[4,1,36], index: 4, kind: input, shape index: {}]
  %s5 = inlined_call_operand.vmem [shape: f32[2,4,8,8], index: 5, kind: output, shape index: {0}]
  %s6 = inlined_call_operand.vmem [shape: f32[2,4,1,1], index: 6, kind: output, shape index: {1}]
  %s7 = inlined_call_operand.vmem [shape: f32[2,4,1,1], index: 7, kind: output, shape index: {2}]
  %8 = xla_tuple %s5, %s6, %s7
  %s9 = sld [smem:[#allocation0]]
  $region69: #{dhfe_down_block2d.2} parent=0
    _
  %s11 = ssub.s32 1, %s9
  %s12 = scalar_select 0, %s11, %s9
  loop: start=0, step=1, limit=10
  $region2: #{dhfe_down_block2d.2} parent=0 // loop_pre_header
    _
  $region3: #{dhfe_down_block2d.2} parent=0 // loop_header
    %s14 = sphi 0, %s18
    %p15 = scmp.ge.s32.totalorder %s14, 10
    %s21 = sphi 0, %s33
    %s22 = sphi 0, %s29
    %s23 = sphi 0, %s21
    %s24 = sphi 0, %s22
    %s25 = sphi 0, %s23
    %s26 = sphi 0, %s24
    %s38 = sphi 0, %s40
    %s41 = sphi 0, %s38
    %s42 = sphi 0, %s41
    %s58 = sphi 0, %s42
    %s66 = sphi 0, %s68
    %s69 = sphi 0, %s66
    %s70 = sphi 0, %s69
    %s86 = sphi 0, %s70
    %s94 = sphi 0, %s96
    %s97 = sphi 0, %s94
    %s98 = sphi 0, %s97
    %s114 = sphi 0, %s98
    %s122 = sphi 0, %s124
    %s125 = sphi 0, %s122
    %s126 = sphi 0, %s125
    %s142 = sphi 0, %s126
    %s148 = sphi 0, %s150
    %s151 = sphi 0, %s148
    %s152 = sphi 0, %s151
    %s168 = sphi 0, %s152
    %s176 = sphi 0, %s178
    %s179 = sphi 0, %s176
    %s180 = sphi 0, %s179
    %s196 = sphi 0, %s180
    %s204 = sphi 0, %s206
    %s207 = sphi 0, %s204
    %s208 = sphi 0, %s207
    %s224 = sphi 0, %s208
    %s232 = sphi 0, %s234
    %s235 = sphi 0, %s232
    %s236 = sphi 0, %s235
    %s252 = sphi 0, %s236
  $region4: #{dhfe_down_block2d.2} parent=0 // loop_header_branch
    %17 = sbr.rel (%p15) target = $region8
  $region5: #{dhfe_down_block2d.2} parent=0 // loop_body
    %s19 = ssub.s32 %s14, 1
    %s20 = ssub.s32 %s14, 2
    %s27 = sadd.s32 1, %s22
    %p28 = scmp.ge.s32.totalorder %s27, 4
    %s29 = scalar_select %p28, 0, %s27
    %s30 = sadd.s32 1, %s21
    %s31 = scalar_select %p28, %s30, %s21
    %p32 = scmp.ge.s32.totalorder %s31, 2
    %s33 = scalar_select %p32, 0, %s31
    %s34 = ssub.s32 %s21, %s33
    %s35 = ssub.s32 %s22, %s29
    %s36 = sor.u32 %s34, %s35
    %p37 = scmp.eq.s32.totalorder %s36, 0
    %s39 = sadd.s32 %s38, 1
    %s40 = scalar_select %p37, %s38, %s39
    %p43 = pneg %p37
    %p44 = scmp.eq.s32.totalorder %s14, 7
    %p45 = por %p43, %p44
    %p46 = scmp.ne.s32.totalorder %s38, %s41
    %p47 = scmp.eq.s32.totalorder %s14, 0
    %p48 = por %p46, %p47
    %p49 = scmp.ne.s32.totalorder %s38, %s41
    %p50 = scmp.eq.s32.totalorder %s19, 7
    %p51 = por %p49, %p50
    %p52 = scmp.ne.s32.totalorder %s41, %s42
    %p53 = scmp.eq.s32.totalorder %s19, 0
    %p54 = por %p52, %p53
    %p55 = scmp.ne.s32.totalorder %s41, %s42
    %p56 = scmp.eq.s32.totalorder %s20, 7
    %p57 = por %p55, %p56
    %p59 = scmp.ne.s32.totalorder %s42, %s58
    %p60 = scmp.eq.s32.totalorder %s20, 0
    %p61 = por %p59, %p60
    %s62 = ssub.s32 %s21, %s33
    %s63 = ssub.s32 %s22, %s29
    %s64 = sor.u32 %s62, %s63
    %p65 = scmp.eq.s32.totalorder %s64, 0
    %s67 = sadd.s32 %s66, 1
    %s68 = scalar_select %p65, %s66, %s67
    %p71 = pneg %p65
    %p72 = scmp.eq.s32.totalorder %s14, 7
    %p73 = por %p71, %p72
    %p74 = scmp.ne.s32.totalorder %s66, %s69
    %p75 = scmp.eq.s32.totalorder %s14, 0
    %p76 = por %p74, %p75
    %p77 = scmp.ne.s32.totalorder %s66, %s69
    %p78 = scmp.eq.s32.totalorder %s19, 7
    %p79 = por %p77, %p78
    %p80 = scmp.ne.s32.totalorder %s69, %s70
    %p81 = scmp.eq.s32.totalorder %s19, 0
    %p82 = por %p80, %p81
    %p83 = scmp.ne.s32.totalorder %s69, %s70
    %p84 = scmp.eq.s32.totalorder %s20, 7
    %p85 = por %p83, %p84
    %p87 = scmp.ne.s32.totalorder %s70, %s86
    %p88 = scmp.eq.s32.totalorder %s20, 0
    %p89 = por %p87, %p88
    %s90 = ssub.s32 %s21, %s33
    %s91 = ssub.s32 %s22, %s29
    %s92 = sor.u32 %s90, %s91
    %p93 = scmp.eq.s32.totalorder %s92, 0
    %s95 = sadd.s32 %s94, 1
    %s96 = scalar_select %p93, %s94, %s95
    %p99 = pneg %p93
    %p100 = scmp.eq.s32.totalorder %s14, 7
    %p101 = por %p99, %p100
    %p102 = scmp.ne.s32.totalorder %s94, %s97
    %p103 = scmp.eq.s32.totalorder %s14, 0
    %p104 = por %p102, %p103
    %p105 = scmp.ne.s32.totalorder %s94, %s97
    %p106 = scmp.eq.s32.totalorder %s19, 7
    %p107 = por %p105, %p106
    %p108 = scmp.ne.s32.totalorder %s97, %s98
    %p109 = scmp.eq.s32.totalorder %s19, 0
    %p110 = por %p108, %p109
    %p111 = scmp.ne.s32.totalorder %s97, %s98
    %p112 = scmp.eq.s32.totalorder %s20, 7
    %p113 = por %p111, %p112
    %p115 = scmp.ne.s32.totalorder %s98, %s114
    %p116 = scmp.eq.s32.totalorder %s20, 0
    %p117 = por %p115, %p116
    %s118 = ssub.s32 %s21, %s33
    %s119 = ssub.s32 %s22, %s29
    %s120 = sor.u32 %s118, %s119
    %p121 = scmp.eq.s32.totalorder %s120, 0
    %s123 = sadd.s32 %s122, 1
    %s124 = scalar_select %p121, %s122, %s123
    %p127 = pneg %p121
    %p128 = scmp.eq.s32.totalorder %s14, 7
    %p129 = por %p127, %p128
    %p130 = scmp.ne.s32.totalorder %s122, %s125
    %p131 = scmp.eq.s32.totalorder %s14, 0
    %p132 = por %p130, %p131
    %p133 = scmp.ne.s32.totalorder %s122, %s125
    %p134 = scmp.eq.s32.totalorder %s19, 7
    %p135 = por %p133, %p134
    %p136 = scmp.ne.s32.totalorder %s125, %s126
    %p137 = scmp.eq.s32.totalorder %s19, 0
    %p138 = por %p136, %p137
    %p139 = scmp.ne.s32.totalorder %s125, %s126
    %p140 = scmp.eq.s32.totalorder %s20, 7
    %p141 = por %p139, %p140
    %p143 = scmp.ne.s32.totalorder %s126, %s142
    %p144 = scmp.eq.s32.totalorder %s20, 0
    %p145 = por %p143, %p144
    %s146 = ssub.s32 %s22, %s29
    %p147 = scmp.eq.s32.totalorder %s146, 0
    %s149 = sadd.s32 %s148, 1
    %s150 = scalar_select %p147, %s148, %s149
    %p153 = pneg %p147
    %p154 = scmp.eq.s32.totalorder %s14, 7
    %p155 = por %p153, %p154
    %p156 = scmp.ne.s32.totalorder %s148, %s151
    %p157 = scmp.eq.s32.totalorder %s14, 0
    %p158 = por %p156, %p157
    %p159 = scmp.ne.s32.totalorder %s148, %s151
    %p160 = scmp.eq.s32.totalorder %s19, 7
    %p161 = por %p159, %p160
    %p162 = scmp.ne.s32.totalorder %s151, %s152
    %p163 = scmp.eq.s32.totalorder %s19, 0
    %p164 = por %p162, %p163
    %p165 = scmp.ne.s32.totalorder %s151, %s152
    %p166 = scmp.eq.s32.totalorder %s20, 7
    %p167 = por %p165, %p166
    %p169 = scmp.ne.s32.totalorder %s152, %s168
    %p170 = scmp.eq.s32.totalorder %s20, 0
    %p171 = por %p169, %p170
    %s172 = ssub.s32 %s21, %s33
    %s173 = ssub.s32 %s22, %s29
    %s174 = sor.u32 %s172, %s173
    %p175 = scmp.eq.s32.totalorder %s174, 0
    %s177 = sadd.s32 %s176, 1
    %s178 = scalar_select %p175, %s176, %s177
    %p181 = pneg %p175
    %p182 = scmp.eq.s32.totalorder %s14, 7
    %p183 = por %p181, %p182
    %p184 = scmp.ne.s32.totalorder %s176, %s179
    %p185 = scmp.eq.s32.totalorder %s14, 0
    %p186 = por %p184, %p185
    %p187 = scmp.ne.s32.totalorder %s176, %s179
    %p188 = scmp.eq.s32.totalorder %s19, 7
    %p189 = por %p187, %p188
    %p190 = scmp.ne.s32.totalorder %s179, %s180
    %p191 = scmp.eq.s32.totalorder %s19, 0
    %p192 = por %p190, %p191
    %p193 = scmp.ne.s32.totalorder %s179, %s180
    %p194 = scmp.eq.s32.totalorder %s20, 7
    %p195 = por %p193, %p194
    %p197 = scmp.ne.s32.totalorder %s180, %s196
    %p198 = scmp.eq.s32.totalorder %s20, 0
    %p199 = por %p197, %p198
    %s200 = ssub.s32 %s21, %s33
    %s201 = ssub.s32 %s22, %s29
    %s202 = sor.u32 %s200, %s201
    %p203 = scmp.eq.s32.totalorder %s202, 0
    %s205 = sadd.s32 %s204, 1
    %s206 = scalar_select %p203, %s204, %s205
    %p209 = pneg %p203
    %p210 = scmp.eq.s32.totalorder %s14, 7
    %p211 = por %p209, %p210
    %p212 = scmp.ne.s32.totalorder %s204, %s207
    %p213 = scmp.eq.s32.totalorder %s14, 0
    %p214 = por %p212, %p213
    %p215 = scmp.ne.s32.totalorder %s204, %s207
    %p216 = scmp.eq.s32.totalorder %s19, 7
    %p217 = por %p215, %p216
    %p218 = scmp.ne.s32.totalorder %s207, %s208
    %p219 = scmp.eq.s32.totalorder %s19, 0
    %p220 = por %p218, %p219
    %p221 = scmp.ne.s32.totalorder %s207, %s208
    %p222 = scmp.eq.s32.totalorder %s20, 7
    %p223 = por %p221, %p222
    %p225 = scmp.ne.s32.totalorder %s208, %s224
    %p226 = scmp.eq.s32.totalorder %s20, 0
    %p227 = por %p225, %p226
    %s228 = ssub.s32 %s21, %s33
    %s229 = ssub.s32 %s22, %s29
    %s230 = sor.u32 %s228, %s229
    %p231 = scmp.eq.s32.totalorder %s230, 0
    %s233 = sadd.s32 %s232, 1
    %s234 = scalar_select %p231, %s232, %s233
    %p237 = pneg %p231
    %p238 = scmp.eq.s32.totalorder %s14, 7
    %p239 = por %p237, %p238
    %p240 = scmp.ne.s32.totalorder %s232, %s235
    %p241 = scmp.eq.s32.totalorder %s14, 0
    %p242 = por %p240, %p241
    %p243 = scmp.ne.s32.totalorder %s232, %s235
    %p244 = scmp.eq.s32.totalorder %s19, 7
    %p245 = por %p243, %p244
    %p246 = scmp.ne.s32.totalorder %s235, %s236
    %p247 = scmp.eq.s32.totalorder %s19, 0
    %p248 = por %p246, %p247
    %p249 = scmp.ne.s32.totalorder %s235, %s236
    %p250 = scmp.eq.s32.totalorder %s20, 7
    %p251 = por %p249, %p250
    %p253 = scmp.ne.s32.totalorder %s236, %s252
    %p254 = scmp.eq.s32.totalorder %s20, 0
    %p255 = por %p253, %p254
    %p256 = scmp.le.s32.totalorder 1, %s14
    %p257 = scmp.lt.s32.totalorder %s14, 9
    %p258 = pnand %p256, %p257
    %p259 = pneg %p258
    // Predicated region
    $region9: #{dhfe_down_block2d.2} parent=5 // pred_check
      _
    $region10: #{dhfe_down_block2d.2} parent=5 // pred_check_branch
      %261 = sbr.rel (%p258) target = $region12
    $region11: #{dhfe_down_block2d.2} parent=5 // pred_region
      %s262 = ssub.s32 %s14, 1
    $region12: #{dhfe_down_block2d.2} parent=5 // pred_fallthru
      _
    %p263 = scmp.lt.s32.totalorder %s14, 8
    // Predicated region
    $region13: #{dhfe_down_block2d.2} parent=5 // pred_check
      %p264 = pneg %p263
    $region14: #{dhfe_down_block2d.2} parent=5 // pred_check_branch
      %266 = sbr.rel (%p264) target = $region16
    $region15: #{dhfe_down_block2d.2} parent=5 // pred_region
      // Predicated region
      $region17: #{dhfe_down_block2d.2} parent=15 // pred_check
        %p267 = pneg %p48
      $region18: #{dhfe_down_block2d.2} parent=15 // pred_check_branch
        %269 = sbr.rel (%p267) target = $region20
      $region19: #{dhfe_down_block2d.2} parent=15 // pred_region
        %p270 = scmp.lt.s32.totalorder %s21, 1
        %s271 = scalar_select %p270, %s21, 1
        %p272 = scmp.lt.s32.totalorder %s22, 3
        %s273 = scalar_select %p272, %s22, 3
        %s274 = smul.addr %s273, 2
        %s275 = smul.addr %s271, 8
        %s276 = sadd.s32 %s274, %s275
        %s277 = smul.addr %s276, 8
        %s278 = scalar_lea.vmem %s0, %s277
      $region20: #{dhfe_down_block2d.2} parent=15 // pred_fallthru
        _
      // Predicated region
      $region21: #{dhfe_down_block2d.2} parent=15 // pred_check
        %p279 = pneg %p76
      $region22: #{dhfe_down_block2d.2} parent=15 // pred_check_branch
        %281 = sbr.rel (%p279) target = $region24
      $region23: #{dhfe_down_block2d.2} parent=15 // pred_region
        %p282 = scmp.lt.s32.totalorder %s21, 1
        %s283 = scalar_select %p282, %s21, 1
        %p284 = scmp.lt.s32.totalorder %s22, 3
        %s285 = scalar_select %p284, %s22, 3
        %s286 = smul.addr %s285, 2
        %s287 = smul.addr %s283, 8
        %s288 = sadd.s32 %s286, %s287
        %s289 = smul.addr %s288, 8
        %s290 = scalar_lea.vmem %s1, %s289
      $region24: #{dhfe_down_block2d.2} parent=15 // pred_fallthru
        _
      // Predicated region
      $region25: #{dhfe_down_block2d.2} parent=15 // pred_check
        %p291 = pneg %p104
      $region26: #{dhfe_down_block2d.2} parent=15 // pred_check_branch
        %293 = sbr.rel (%p291) target = $region28
      $region27: #{dhfe_down_block2d.2} parent=15 // pred_region
        %p294 = scmp.lt.s32.totalorder %s21, 1
        %s295 = scalar_select %p294, %s21, 1
        %p296 = scmp.lt.s32.totalorder %s22, 3
        %s297 = scalar_select %p296, %s22, 3
        %s298 = smul.addr %s297, 2
        %s299 = smul.addr %s295, 8
        %s300 = sadd.s32 %s298, %s299
        %s301 = smul.addr %s300, 8
        %s302 = scalar_lea.vmem %s2, %s301
      $region28: #{dhfe_down_block2d.2} parent=15 // pred_fallthru
        _
      // Predicated region
      $region29: #{dhfe_down_block2d.2} parent=15 // pred_check
        %p303 = pneg %p132
      $region30: #{dhfe_down_block2d.2} parent=15 // pred_check_branch
        %305 = sbr.rel (%p303) target = $region32
      $region31: #{dhfe_down_block2d.2} parent=15 // pred_region
        %p306 = scmp.lt.s32.totalorder %s21, 1
        %s307 = scalar_select %p306, %s21, 1
        %p308 = scmp.lt.s32.totalorder %s22, 3
        %s309 = scalar_select %p308, %s22, 3
        %s310 = smul.addr %s309, 2
        %s311 = smul.addr %s307, 8
        %s312 = sadd.s32 %s310, %s311
        %s313 = smul.addr %s312, 8
        %s314 = scalar_lea.vmem %s3, %s313
      $region32: #{dhfe_down_block2d.2} parent=15 // pred_fallthru
        _
      // Predicated region
      $region33: #{dhfe_down_block2d.2} parent=15 // pred_check
        %p315 = pneg %p158
      $region34: #{dhfe_down_block2d.2} parent=15 // pred_check_branch
        %317 = sbr.rel (%p315) target = $region36
      $region35: #{dhfe_down_block2d.2} parent=15 // pred_region
        %p318 = scmp.lt.s32.totalorder %s22, 3
        %s319 = scalar_select %p318, %s22, 3
        %s320 = scalar_lea.vmem %s4, %s319
      $region36: #{dhfe_down_block2d.2} parent=15 // pred_fallthru
        _
    $region16: #{dhfe_down_block2d.2} parent=5 // pred_fallthru
      _
    %p321 = scmp.le.s32.totalorder 1, %s14
    %p322 = scmp.lt.s32.totalorder %s14, 9
    %p323 = pnand %p321, %p322
    %p324 = pneg %p323
    // Predicated region
    $region37: #{dhfe_down_block2d.2} parent=5 // pred_check
      _
    $region38: #{dhfe_down_block2d.2} parent=5 // pred_check_branch
      %326 = sbr.rel (%p323) target = $region40
    $region39: #{dhfe_down_block2d.2} parent=5 // pred_region
      %s327 = ssub.s32 %s14, 1
      %p328 = scmp.lt.s32.totalorder %s23, 1
      %s329 = scalar_select %p328, %s23, 1
      %p330 = scmp.lt.s32.totalorder %s24, 3
      %s331 = scalar_select %p330, %s24, 3
      %s332 = smul.addr %s331, 2
      %s333 = smul.addr %s329, 8
      %s334 = sadd.s32 %s332, %s333
      %s335 = smul.addr %s334, 8
      %s336 = scalar_lea.vmem %s0, %s335
      %p337 = pneg %p54
      %p338 = pneg %p51
      %p339 = scmp.lt.s32.totalorder %s23, 1
      %s340 = scalar_select %p339, %s23, 1
      %p341 = scmp.lt.s32.totalorder %s24, 3
      %s342 = scalar_select %p341, %s24, 3
      %s343 = smul.addr %s342, 2
      %s344 = smul.addr %s340, 8
      %s345 = sadd.s32 %s343, %s344
      %s346 = smul.addr %s345, 8
      %s347 = scalar_lea.vmem %s1, %s346
      %p348 = pneg %p82
      %p349 = pneg %p79
      %p350 = scmp.lt.s32.totalorder %s23, 1
      %s351 = scalar_select %p350, %s23, 1
      %p352 = scmp.lt.s32.totalorder %s24, 3
      %s353 = scalar_select %p352, %s24, 3
      %s354 = smul.addr %s353, 2
      %s355 = smul.addr %s351, 8
      %s356 = sadd.s32 %s354, %s355
      %s357 = smul.addr %s356, 8
      %s358 = scalar_lea.vmem %s2, %s357
      %p359 = pneg %p110
      %p360 = pneg %p107
      %p361 = scmp.lt.s32.totalorder %s23, 1
      %s362 = scalar_select %p361, %s23, 1
      %p363 = scmp.lt.s32.totalorder %s24, 3
      %s364 = scalar_select %p363, %s24, 3
      %s365 = smul.addr %s364, 2
      %s366 = smul.addr %s362, 8
      %s367 = sadd.s32 %s365, %s366
      %s368 = smul.addr %s367, 8
      %s369 = scalar_lea.vmem %s3, %s368
      %p370 = pneg %p138
      %p371 = pneg %p135
      %p372 = scmp.lt.s32.totalorder %s24, 3
      %s373 = scalar_select %p372, %s24, 3
      %s374 = scalar_lea.vmem %s4, %s373
      %p375 = pneg %p164
      %p376 = pneg %p161
      %p377 = pneg %p192
      %p378 = pneg %p189
      %p379 = scmp.lt.s32.totalorder %s23, 1
      %s380 = scalar_select %p379, %s23, 1
      %p381 = scmp.lt.s32.totalorder %s24, 3
      %s382 = scalar_select %p381, %s24, 3
      %s383 = smul.addr %s380, 4
      %s384 = sadd.s32 %s382, %s383
      %s385 = smul.addr %s384, 8
      %s386 = scalar_lea.vmem %s5, %s385
      %p387 = pneg %p220
      %p388 = pneg %p217
      %p389 = scmp.lt.s32.totalorder %s23, 1
      %s390 = scalar_select %p389, %s23, 1
      %p391 = scmp.lt.s32.totalorder %s24, 3
      %s392 = scalar_select %p391, %s24, 3
      %s393 = smul.addr %s390, 4
      %s394 = sadd.s32 %s392, %s393
      %s395 = scalar_lea.vmem %s6, %s394
      %p396 = pneg %p248
      %p397 = pneg %p245
      %p398 = scmp.lt.s32.totalorder %s23, 1
      %s399 = scalar_select %p398, %s23, 1
      %p400 = scmp.lt.s32.totalorder %s24, 3
      %s401 = scalar_select %p400, %s24, 3
      %s402 = smul.addr %s399, 4
      %s403 = sadd.s32 %s401, %s402
      %s404 = scalar_lea.vmem %s7, %s403
      %p405 = scmp.lt.s32.totalorder %s23, 1
      %s406 = scalar_select %p405, %s23, 1
      %p407 = scmp.lt.s32.totalorder %s24, 3
      %s408 = scalar_select %p407, %s24, 3
      %s409 = smul.addr %s408, 2
      %s410 = smul.addr %s406, 8
      %s411 = sadd.s32 %s409, %s410
      %s412 = smul.addr %s411, 8
      %s413 = scalar_lea.vmem %s0, %s412
      %p414 = scmp.lt.s32.totalorder %s23, 1
      %s415 = scalar_select %p414, %s23, 1
      %p416 = scmp.lt.s32.totalorder %s24, 3
      %s417 = scalar_select %p416, %s24, 3
      %s418 = smul.addr %s417, 2
      %s419 = smul.addr %s415, 8
      %s420 = sadd.s32 %s418, %s419
      %s421 = smul.addr %s420, 8
      %s422 = scalar_lea.vmem %s1, %s421
      %p423 = scmp.lt.s32.totalorder %s23, 1
      %s424 = scalar_select %p423, %s23, 1
      %p425 = scmp.lt.s32.totalorder %s24, 3
      %s426 = scalar_select %p425, %s24, 3
      %s427 = smul.addr %s426, 2
      %s428 = smul.addr %s424, 8
      %s429 = sadd.s32 %s427, %s428
      %s430 = smul.addr %s429, 8
      %s431 = scalar_lea.vmem %s2, %s430
      %p432 = scmp.lt.s32.totalorder %s23, 1
      %s433 = scalar_select %p432, %s23, 1
      %p434 = scmp.lt.s32.totalorder %s24, 3
      %s435 = scalar_select %p434, %s24, 3
      %s436 = smul.addr %s435, 2
      %s437 = smul.addr %s433, 8
      %s438 = sadd.s32 %s436, %s437
      %s439 = smul.addr %s438, 8
      %s440 = scalar_lea.vmem %s3, %s439
      %p441 = scmp.lt.s32.totalorder %s24, 3
      %s442 = scalar_select %p441, %s24, 3
      %s443 = scalar_lea.vmem %s4, %s442
      %p444 = scmp.lt.s32.totalorder %s23, 1
      %s445 = scalar_select %p444, %s23, 1
      %p446 = scmp.lt.s32.totalorder %s24, 3
      %s447 = scalar_select %p446, %s24, 3
      %s448 = smul.addr %s445, 4
      %s449 = sadd.s32 %s447, %s448
      %s450 = smul.addr %s449, 8
      %s451 = scalar_lea.vmem %s5, %s450
      %p452 = scmp.lt.s32.totalorder %s23, 1
      %s453 = scalar_select %p452, %s23, 1
      %p454 = scmp.lt.s32.totalorder %s24, 3
      %s455 = scalar_select %p454, %s24, 3
      %s456 = smul.addr %s453, 4
      %s457 = sadd.s32 %s455, %s456
      %s458 = scalar_lea.vmem %s6, %s457
      %p459 = scmp.lt.s32.totalorder %s23, 1
      %s460 = scalar_select %p459, %s23, 1
      %p461 = scmp.lt.s32.totalorder %s24, 3
      %s462 = scalar_select %p461, %s24, 3
      %s463 = smul.addr %s460, 4
      %s464 = sadd.s32 %s462, %s463
      %s465 = scalar_lea.vmem %s7, %s464
      %v466 = vld [vmem:[%s413] sm:$0xff]
      %v467 = vld [vmem:[%s413 + $0x8] sm:$0x1]
      %v468 = vld [vmem:[%s422] sm:$0xff]
      %v469 = vld [vmem:[%s422 + $0x8] sm:$0x1]
      %v470 = vld [vmem:[%s431] sm:$0xff]
      %v471 = vld [vmem:[%s440] sm:$0xff]
      %v472 = vld [vmem:[%s443] sm:$0x1]
      %v474 = vlaneseq
      %v475 = vshrl.u32 %v474, 7
      %v476 = vsub.s32 0, %v475
      %v477 = vrot.slane %v472, %v476
      %478 = vset.pattern.permute.xlu0 0
      %479 = vperm.xlu0 %478, %v477
      %v480 = vpop.permute.xlu0 %479
      %v482 = vmul.f32 %v466, %v480
      %v483 = vadd.f32 %v482, 0.0
      %484 = vset.pattern.permute.xlu0 9
      %485 = vperm.xlu0 %484, %v477
      %v486 = vpop.permute.xlu0 %485
      %v488 = vmul.f32 %v466, %v486
      %v489 = vadd.f32 %v488, 0.0
      %490 = vset.pattern.permute.xlu0 1
      %491 = vperm.xlu0 %490, %v477
      %v492 = vpop.permute.xlu0 %491
      %v494 = vmul.f32 %v468, %v492
      %v495 = vadd.f32 %v483, %v494
      %496 = vset.pattern.permute.xlu0 10
      %497 = vperm.xlu0 %496, %v477
      %v498 = vpop.permute.xlu0 %497
      %v500 = vmul.f32 %v468, %v498
      %v501 = vadd.f32 %v489, %v500
      %502 = vset.pattern.permute.xlu0 2
      %503 = vperm.xlu0 %502, %v477
      %v504 = vpop.permute.xlu0 %503
      %v506 = vmul.f32 %v466, %v504
      %508 = vrot.lane.b32.xlu0 %v506, 127
      %v509 = vpop.permute.xlu0 %508
      %v511 = vadd.f32 %v495, %v509
      %512 = vset.pattern.permute.xlu0 11
      %513 = vperm.xlu0 %512, %v477
      %v514 = vpop.permute.xlu0 %513
      %v516 = vmul.f32 %v466, %v514
      %518 = vrot.lane.b32.xlu0 %v516, 127
      %v519 = vpop.permute.xlu0 %518
      %v521 = vadd.f32 %v501, %v519
      %522 = vset.pattern.permute.xlu0 3
      %523 = vperm.xlu0 %522, %v477
      %v524 = vpop.permute.xlu0 %523
      %v526 = vmul.f32 %v470, %v524
      %v527 = vadd.f32 %v511, %v526
      %528 = vset.pattern.permute.xlu0 12
      %529 = vperm.xlu0 %528, %v477
      %v530 = vpop.permute.xlu0 %529
      %v532 = vmul.f32 %v470, %v530
      %v533 = vadd.f32 %v521, %v532
      %534 = vset.pattern.permute.xlu0 4
      %535 = vperm.xlu0 %534, %v477
      %v536 = vpop.permute.xlu0 %535
      %v538 = vmul.f32 %v471, %v536
      %v539 = vadd.f32 %v527, %v538
      %540 = vset.pattern.permute.xlu0 13
      %541 = vperm.xlu0 %540, %v477
      %v542 = vpop.permute.xlu0 %541
      %v544 = vmul.f32 %v471, %v542
      %v545 = vadd.f32 %v533, %v544
      %546 = vset.pattern.permute.xlu0 5
      %547 = vperm.xlu0 %546, %v477
      %v548 = vpop.permute.xlu0 %547
      %v550 = vmul.f32 %v470, %v548
      %552 = vrot.lane.b32.xlu0 %v550, 127
      %v553 = vpop.permute.xlu0 %552
      %v555 = vadd.f32 %v539, %v553
      %556 = vset.pattern.permute.xlu0 14
      %557 = vperm.xlu0 %556, %v477
      %v558 = vpop.permute.xlu0 %557
      %v560 = vmul.f32 %v470, %v558
      %562 = vrot.lane.b32.xlu0 %v560, 127
      %v563 = vpop.permute.xlu0 %562
      %v565 = vadd.f32 %v545, %v563
      %566 = vset.pattern.permute.xlu0 6
      %567 = vperm.xlu0 %566, %v477
      %v568 = vpop.permute.xlu0 %567
      %v570 = vmul.f32 %v466, %v568
      %v571 = vmul.f32 %v467, %v568
      %vm574 = vcmask 1046528
      %v575 = vrot.slane %v570, 1
      %v576 = vrot.slane %v571, 1
      %v577 = vsel %vm574, %v575, %v576
      %v579 = vadd.f32 %v555, %v577
      %580 = vset.pattern.permute.xlu0 15
      %581 = vperm.xlu0 %580, %v477
      %v582 = vpop.permute.xlu0 %581
      %v584 = vmul.f32 %v466, %v582
      %v585 = vmul.f32 %v467, %v582
      %v588 = vrot.slane %v584, 1
      %v589 = vrot.slane %v585, 1
      %v590 = vsel %vm574, %v588, %v589
      %v592 = vadd.f32 %v565, %v590
      %593 = vset.pattern.permute.xlu0 7
      %594 = vperm.xlu0 %593, %v477
      %v595 = vpop.permute.xlu0 %594
      %v597 = vmul.f32 %v468, %v595
      %v598 = vmul.f32 %v469, %v595
      %v601 = vrot.slane %v597, 1
      %v602 = vrot.slane %v598, 1
      %v603 = vsel %vm574, %v601, %v602
      %v605 = vadd.f32 %v579, %v603
      %606 = vset.pattern.permute.xlu0 16
      %607 = vperm.xlu0 %606, %v477
      %v608 = vpop.permute.xlu0 %607
      %v610 = vmul.f32 %v468, %v608
      %v611 = vmul.f32 %v469, %v608
      %v614 = vrot.slane %v610, 1
      %v615 = vrot.slane %v611, 1
      %v616 = vsel %vm574, %v614, %v615
      %v618 = vadd.f32 %v592, %v616
      %619 = vset.pattern.permute.xlu0 8
      %620 = vperm.xlu0 %619, %v477
      %v621 = vpop.permute.xlu0 %620
      %v623 = vmul.f32 %v466, %v621
      %v624 = vmul.f32 %v467, %v621
      %v627 = vrot.slane %v623, 1
      %v628 = vrot.slane %v624, 1
      %v629 = vsel %vm574, %v627, %v628
      %630 = vrot.lane.b32.xlu0 %v629, 127
      %v631 = vpop.permute.xlu0 %630
      %v633 = vadd.f32 %v605, %v631
      %634 = vset.pattern.permute.xlu0 17
      %635 = vperm.xlu0 %634, %v477
      %v636 = vpop.permute.xlu0 %635
      %v638 = vmul.f32 %v466, %v636
      %v639 = vmul.f32 %v467, %v636
      %v642 = vrot.slane %v638, 1
      %v643 = vrot.slane %v639, 1
      %v644 = vsel %vm574, %v642, %v643
      %645 = vrot.lane.b32.xlu0 %v644, 127
      %v646 = vpop.permute.xlu0 %645
      %v648 = vadd.f32 %v618, %v646
      %vm649 = vcmask 73728
      %650 = vst.msk [vmem:[#allocation2] sm:$0x1] %vm649, 0.0
      %651 = vst.msk [vmem:[#allocation2 + $0x9] sm:$0x1] %vm649, 0.0
      %vm652 = vcmask 7168
      %653 = vst.msk [vmem:[#allocation2 + $0x1] sm:$0xff] %vm652, 0.0
      %vm654 = vcmask 80968
      %655 = vst.msk [vmem:[#allocation2 + $0x1] sm:$0xff] %vm654, 0.0
      %657 = vrot.lane.b32.xlu0 %v633, 1
      %v658 = vpop.permute.xlu0 %657
      %vm660 = vcmask 72712
      %661 = vst.msk [vmem:[#allocation2 + $0x1] sm:$0xff] %vm660, %v658
      %662 = vst.msk [vmem:[#allocation3] sm:$0x1] %vm649, 0.0
      %663 = vst.msk [vmem:[#allocation3 + $0x9] sm:$0x1] %vm649, 0.0
      %664 = vst.msk [vmem:[#allocation3 + $0x1] sm:$0xff] %vm652, 0.0
      %665 = vst.msk [vmem:[#allocation3 + $0x1] sm:$0xff] %vm654, 0.0
      %667 = vrot.lane.b32.xlu0 %v648, 1
      %v668 = vpop.permute.xlu0 %667
      %670 = vst.msk [vmem:[#allocation3 + $0x1] sm:$0xff] %vm660, %v668
      %v671 = vld [vmem:[#allocation2] sm:$0xff]
      %v672 = vld [vmem:[#allocation2 + $0x8] sm:$0x3]
      %v673 = vld [vmem:[#allocation3] sm:$0xff]
      %v674 = vld [vmem:[#allocation3 + $0x8] sm:$0x3]
      %675 = vset.pattern.permute.xlu0 18
      %676 = vperm.xlu0 %675, %v477
      %v677 = vpop.permute.xlu0 %676
      %v679 = vmul.f32 %v671, %v677
      %v680 = vadd.f32 %v679, 0.0
      %681 = vset.pattern.permute.xlu0 27
      %682 = vperm.xlu0 %681, %v477
      %v683 = vpop.permute.xlu0 %682
      %v685 = vmul.f32 %v673, %v683
      %v686 = vadd.f32 %v680, %v685
      %687 = vset.pattern.permute.xlu0 19
      %688 = vperm.xlu0 %687, %v477
      %v689 = vpop.permute.xlu0 %688
      %v691 = vmul.f32 %v671, %v689
      %693 = vrot.lane.b32.xlu0 %v691, 127
      %v694 = vpop.permute.xlu0 %693
      %v696 = vadd.f32 %v686, %v694
      %697 = vset.pattern.permute.xlu0 28
      %698 = vperm.xlu0 %697, %v477
      %v699 = vpop.permute.xlu0 %698
      %v701 = vmul.f32 %v673, %v699
      %703 = vrot.lane.b32.xlu0 %v701, 127
      %v704 = vpop.permute.xlu0 %703
      %v706 = vadd.f32 %v696, %v704
      %707 = vset.pattern.permute.xlu0 20
      %708 = vperm.xlu0 %707, %v477
      %v709 = vpop.permute.xlu0 %708
      %v711 = vmul.f32 %v671, %v709
      %713 = vrot.lane.b32.xlu0 %v711, 126
      %v714 = vpop.permute.xlu0 %713
      %v716 = vadd.f32 %v706, %v714
      %717 = vset.pattern.permute.xlu0 29
      %718 = vperm.xlu0 %717, %v477
      %v719 = vpop.permute.xlu0 %718
      %v721 = vmul.f32 %v673, %v719
      %723 = vrot.lane.b32.xlu0 %v721, 126
      %v724 = vpop.permute.xlu0 %723
      %v726 = vadd.f32 %v716, %v724
      %727 = vset.pattern.permute.xlu0 21
      %728 = vperm.xlu0 %727, %v477
      %v729 = vpop.permute.xlu0 %728
      %v731 = vmul.f32 %v671, %v729
      %v732 = vmul.f32 %v672, %v729
      %v735 = vrot.slane %v731, 1
      %v736 = vrot.slane %v732, 1
      %v737 = vsel %vm574, %v735, %v736
      %v739 = vadd.f32 %v726, %v737
      %740 = vset.pattern.permute.xlu0 30
      %741 = vperm.xlu0 %740, %v477
      %v742 = vpop.permute.xlu0 %741
      %v744 = vmul.f32 %v673, %v742
      %v745 = vmul.f32 %v674, %v742
      %v748 = vrot.slane %v744, 1
      %v749 = vrot.slane %v745, 1
      %v750 = vsel %vm574, %v748, %v749
      %v752 = vadd.f32 %v739, %v750
      %753 = vset.pattern.permute.xlu0 22
      %754 = vperm.xlu0 %753, %v477
      %v755 = vpop.permute.xlu0 %754
      %v757 = vmul.f32 %v671, %v755
      %v758 = vmul.f32 %v672, %v755
      %v761 = vrot.slane %v757, 1
      %v762 = vrot.slane %v758, 1
      %v763 = vsel %vm574, %v761, %v762
      %764 = vrot.lane.b32.xlu0 %v763, 127
      %v765 = vpop.permute.xlu0 %764
      %v767 = vadd.f32 %v752, %v765
      %768 = vset.pattern.permute.xlu0 31
      %769 = vperm.xlu0 %768, %v477
      %v770 = vpop.permute.xlu0 %769
      %v772 = vmul.f32 %v673, %v770
      %v773 = vmul.f32 %v674, %v770
      %v776 = vrot.slane %v772, 1
      %v777 = vrot.slane %v773, 1
      %v778 = vsel %vm574, %v776, %v777
      %779 = vrot.lane.b32.xlu0 %v778, 127
      %v780 = vpop.permute.xlu0 %779
      %v782 = vadd.f32 %v767, %v780
      %783 = vset.pattern.permute.xlu0 23
      %784 = vperm.xlu0 %783, %v477
      %v785 = vpop.permute.xlu0 %784
      %v787 = vmul.f32 %v671, %v785
      %v788 = vmul.f32 %v672, %v785
      %v791 = vrot.slane %v787, 1
      %v792 = vrot.slane %v788, 1
      %v793 = vsel %vm574, %v791, %v792
      %794 = vrot.lane.b32.xlu0 %v793, 126
      %v795 = vpop.permute.xlu0 %794
      %v797 = vadd.f32 %v782, %v795
      %798 = vset.pattern.permute.xlu0 32
      %799 = vperm.xlu0 %798, %v477
      %v800 = vpop.permute.xlu0 %799
      %v802 = vmul.f32 %v673, %v800
      %v803 = vmul.f32 %v674, %v800
      %v806 = vrot.slane %v802, 1
      %v807 = vrot.slane %v803, 1
      %v808 = vsel %vm574, %v806, %v807
      %809 = vrot.lane.b32.xlu0 %v808, 126
      %v810 = vpop.permute.xlu0 %809
      %v812 = vadd.f32 %v797, %v810
      %813 = vset.pattern.permute.xlu0 24
      %814 = vperm.xlu0 %813, %v477
      %v815 = vpop.permute.xlu0 %814
      %v817 = vmul.f32 %v671, %v815
      %v818 = vmul.f32 %v672, %v815
      %vm821 = vcmask 1045504
      %v822 = vrot.slane %v817, 2
      %v823 = vrot.slane %v818, 2
      %v824 = vsel %vm821, %v822, %v823
      %v826 = vadd.f32 %v812, %v824
      %827 = vset.pattern.permute.xlu0 33
      %828 = vperm.xlu0 %827, %v477
      %v829 = vpop.permute.xlu0 %828
      %v831 = vmul.f32 %v673, %v829
      %v832 = vmul.f32 %v674, %v829
      %v835 = vrot.slane %v831, 2
      %v836 = vrot.slane %v832, 2
      %v837 = vsel %vm821, %v835, %v836
      %v839 = vadd.f32 %v826, %v837
      %840 = vset.pattern.permute.xlu0 25
      %841 = vperm.xlu0 %840, %v477
      %v842 = vpop.permute.xlu0 %841
      %v844 = vmul.f32 %v671, %v842
      %v845 = vmul.f32 %v672, %v842
      %v848 = vrot.slane %v844, 2
      %v849 = vrot.slane %v845, 2
      %v850 = vsel %vm821, %v848, %v849
      %851 = vrot.lane.b32.xlu0 %v850, 127
      %v852 = vpop.permute.xlu0 %851
      %v854 = vadd.f32 %v839, %v852
      %855 = vset.pattern.permute.xlu0 34
      %856 = vperm.xlu0 %855, %v477
      %v857 = vpop.permute.xlu0 %856
      %v859 = vmul.f32 %v673, %v857
      %v860 = vmul.f32 %v674, %v857
      %v863 = vrot.slane %v859, 2
      %v864 = vrot.slane %v860, 2
      %v865 = vsel %vm821, %v863, %v864
      %866 = vrot.lane.b32.xlu0 %v865, 127
      %v867 = vpop.permute.xlu0 %866
      %v869 = vadd.f32 %v854, %v867
      %870 = vset.pattern.permute.xlu0 26
      %871 = vperm.xlu0 %870, %v477
      %v872 = vpop.permute.xlu0 %871
      %v874 = vmul.f32 %v671, %v872
      %v875 = vmul.f32 %v672, %v872
      %v878 = vrot.slane %v874, 2
      %v879 = vrot.slane %v875, 2
      %v880 = vsel %vm821, %v878, %v879
      %881 = vrot.lane.b32.xlu0 %v880, 126
      %v882 = vpop.permute.xlu0 %881
      %v884 = vadd.f32 %v869, %v882
      %885 = vset.pattern.permute.xlu0 35
      %886 = vperm.xlu0 %885, %v477
      %v887 = vpop.permute.xlu0 %886
      %v889 = vmul.f32 %v673, %v887
      %v890 = vmul.f32 %v674, %v887
      %v893 = vrot.slane %v889, 2
      %v894 = vrot.slane %v890, 2
      %v895 = vsel %vm821, %v893, %v894
      %896 = vrot.lane.b32.xlu0 %v895, 126
      %v897 = vpop.permute.xlu0 %896
      %v899 = vadd.f32 %v884, %v897
      %vm900 = vcmask 64512
      %901 = vst.msk [vmem:[%s451] sm:$0xff] %vm900, %v899
      %v902 = vsel %vm900, %v899, 0.0
      %903 = vadd.xlane.f32.xlu0 %v902
      %v904 = vpop.xlane.xlu0 %903
      %v905 = vrot.slane %v904, 4
      %v906 = vadd.f32 %v904, %v905
      %v907 = vrot.slane %v906, 2
      %v908 = vadd.f32 %v906, %v907
      %v909 = vrot.slane %v908, 1
      %v910 = vadd.f32 %v908, %v909
      %s911 = vtos %v910
      %v912 = vstv %s911
      %vm913 = vcmask 0
      %914 = vst.msk [vmem:[%s458] sm:$0x1] %vm913, %v912
      %v915 = vmul.f32 %v899, %v899
      %v916 = vsel %vm900, %v915, 0.0
      %917 = vadd.xlane.f32.xlu0 %v916
      %v918 = vpop.xlane.xlu0 %917
      %v919 = vrot.slane %v918, 4
      %v920 = vadd.f32 %v918, %v919
      %v921 = vrot.slane %v920, 2
      %v922 = vadd.f32 %v920, %v921
      %v923 = vrot.slane %v922, 1
      %v924 = vadd.f32 %v922, %v923
      %s925 = vtos %v924
      %v926 = vstv %s925
      %927 = vst.msk [vmem:[%s465] sm:$0x1] %vm913, %v926
      %p928 = scmp.lt.s32.totalorder %s23, 1
      %s929 = scalar_select %p928, %s23, 1
      %p930 = scmp.lt.s32.totalorder %s24, 3
      %s931 = scalar_select %p930, %s24, 3
      %s932 = smul.addr %s929, 4
      %s933 = sadd.s32 %s931, %s932
      %s934 = smul.addr %s933, 8
      %s935 = scalar_lea.vmem %s5, %s934
      %p936 = scmp.lt.s32.totalorder %s23, 1
      %s937 = scalar_select %p936, %s23, 1
      %p938 = scmp.lt.s32.totalorder %s24, 3
      %s939 = scalar_select %p938, %s24, 3
      %s940 = smul.addr %s937, 4
      %s941 = sadd.s32 %s939, %s940
      %s942 = scalar_lea.vmem %s6, %s941
      %p943 = scmp.lt.s32.totalorder %s23, 1
      %s944 = scalar_select %p943, %s23, 1
      %p945 = scmp.lt.s32.totalorder %s24, 3
      %s946 = scalar_select %p945, %s24, 3
      %s947 = smul.addr %s944, 4
      %s948 = sadd.s32 %s946, %s947
      %s949 = scalar_lea.vmem %s7, %s948
      // Predicated region
      $region41: #{dhfe_down_block2d.2} parent=39 // pred_check
        %p950 = pneg %p189
      $region42: #{dhfe_down_block2d.2} parent=39 // pred_check_branch
        %952 = sbr.rel (%p950) target = $region44
      $region43: #{dhfe_down_block2d.2} parent=39 // pred_region
        _
      $region44: #{dhfe_down_block2d.2} parent=39 // pred_fallthru
        _
      // Predicated region
      $region45: #{dhfe_down_block2d.2} parent=39 // pred_check
        %p953 = pneg %p217
      $region46: #{dhfe_down_block2d.2} parent=39 // pred_check_branch
        %955 = sbr.rel (%p953) target = $region48
      $region47: #{dhfe_down_block2d.2} parent=39 // pred_region
        _
      $region48: #{dhfe_down_block2d.2} parent=39 // pred_fallthru
        _
      // Predicated region
      $region49: #{dhfe_down_block2d.2} parent=39 // pred_check
        %p956 = pneg %p245
      $region50: #{dhfe_down_block2d.2} parent=39 // pred_check_branch
        %958 = sbr.rel (%p956) target = $region52
      $region51: #{dhfe_down_block2d.2} parent=39 // pred_region
        _
      $region52: #{dhfe_down_block2d.2} parent=39 // pred_fallthru
        _
    $region40: #{dhfe_down_block2d.2} parent=5 // pred_fallthru
      _
    %p959 = scmp.le.s32.totalorder 2, %s14
    // Predicated region
    $region53: #{dhfe_down_block2d.2} parent=5 // pred_check
      %p960 = pneg %p959
    $region54: #{dhfe_down_block2d.2} parent=5 // pred_check_branch
      %962 = sbr.rel (%p960) target = $region56
    $region55: #{dhfe_down_block2d.2} parent=5 // pred_region
      %s963 = ssub.s32 %s14, 2
      // Predicated region
      $region57: #{dhfe_down_block2d.2} parent=55 // pred_check
        %p964 = pneg %p195
      $region58: #{dhfe_down_block2d.2} parent=55 // pred_check_branch
        %966 = sbr.rel (%p964) target = $region60
      $region59: #{dhfe_down_block2d.2} parent=55 // pred_region
        %p967 = scmp.lt.s32.totalorder %s25, 1
        %s968 = scalar_select %p967, %s25, 1
        %p969 = scmp.lt.s32.totalorder %s26, 3
        %s970 = scalar_select %p969, %s26, 3
        %s971 = smul.addr %s968, 4
        %s972 = sadd.s32 %s970, %s971
        %s973 = smul.addr %s972, 8
        %s974 = scalar_lea.vmem %s5, %s973
      $region60: #{dhfe_down_block2d.2} parent=55 // pred_fallthru
        _
      // Predicated region
      $region61: #{dhfe_down_block2d.2} parent=55 // pred_check
        %p975 = pneg %p223
      $region62: #{dhfe_down_block2d.2} parent=55 // pred_check_branch
        %977 = sbr.rel (%p975) target = $region64
      $region63: #{dhfe_down_block2d.2} parent=55 // pred_region
        %p978 = scmp.lt.s32.totalorder %s25, 1
        %s979 = scalar_select %p978, %s25, 1
        %p980 = scmp.lt.s32.totalorder %s26, 3
        %s981 = scalar_select %p980, %s26, 3
        %s982 = smul.addr %s979, 4
        %s983 = sadd.s32 %s981, %s982
        %s984 = scalar_lea.vmem %s6, %s983
      $region64: #{dhfe_down_block2d.2} parent=55 // pred_fallthru
        _
      // Predicated region
      $region65: #{dhfe_down_block2d.2} parent=55 // pred_check
        %p985 = pneg %p251
      $region66: #{dhfe_down_block2d.2} parent=55 // pred_check_branch
        %987 = sbr.rel (%p985) target = $region68
      $region67: #{dhfe_down_block2d.2} parent=55 // pred_region
        %p988 = scmp.lt.s32.totalorder %s25, 1
        %s989 = scalar_select %p988, %s25, 1
        %p990 = scmp.lt.s32.totalorder %s26, 3
        %s991 = scalar_select %p990, %s26, 3
        %s992 = smul.addr %s989, 4
        %s993 = sadd.s32 %s991, %s992
        %s994 = scalar_lea.vmem %s7, %s993
      $region68: #{dhfe_down_block2d.2} parent=55 // pred_fallthru
        _
    $region56: #{dhfe_down_block2d.2} parent=5 // pred_fallthru
      _
  $region6: #{dhfe_down_block2d.2} parent=0 // loop_footer
    %s18 = sadd.s32 1, %s14
  $region7: #{dhfe_down_block2d.2} parent=0 // loop_footer_branch
    %13 = sbr.rel target = $region3
  $region8: #{dhfe_down_block2d.2} parent=0 // loop_exit
    _

// kernel: dhfe_down_block2d.3
$region0: #{dhfe_down_block2d.3}
  #allocation0 [shape = 'u32[]', space=smem, size = 0x4, offset = 0x4, fixed_abs, tag = 'smem constant byte address 0x4 - core index']
  #allocation1 [shape = 'u32[144,128]{1,0:T(1,128)}', space=vmem, size = 0x12000, scoped, tag = 'internal scratch']
  %s0 = inlined_call_operand.vmem [shape: f32[2,4,8,8], index: 0, kind: input, shape index: {}]
  %s1 = inlined_call_operand.vmem [shape: f32[1,4], index: 1, kind: input, shape index: {}]
  %s2 = inlined_call_operand.vmem [shape: f32[1,4], index: 2, kind: input, shape index: {}]
  %s3 = inlined_call_operand.vmem [shape: f32[8,4], index: 3, kind: input, shape index: {}]
  %s4 = inlined_call_operand.vmem [shape: f32[1,8], index: 4, kind: input, shape index: {}]
  %s5 = inlined_call_operand.hbm [shape: f32[2,8,8,8], index: 5, kind: output, shape index: {}]
  %s6 = sld [smem:[#allocation0]]
  $region53: #{dhfe_down_block2d.3} parent=0
    _
  %s8 = ssub.s32 1, %s6
  %s9 = scalar_select 0, %s8, %s6
  $region1: #{dhfe_down_block2d.3} parent=0
    #allocation2 [shape = 'u8[65536]{0}', space=vmem, size = 0x10000, scoped, tag = 'output window, operand 0']
    #allocation3 [shape = 's32[2]{0}', space=sflag, size = 0x8, scoped, tag = 'scoped memory for dhfe_down_block2d.3']
    %10 = vsyncpa [#allocation3], 0
    %s11 = scalar_lea.sflag [#allocation3], 1
    %12 = vsyncpa %s11, 0
    loop: start=0, step=1, limit=4
    $region2: #{dhfe_down_block2d.3} parent=1 // loop_pre_header
      _
    $region3: #{dhfe_down_block2d.3} parent=1 // loop_header
      %s14 = sphi 0, %s18
      %p15 = scmp.ge.s32.totalorder %s14, 4
      %s21 = sphi 0, %s33
      %s22 = sphi 0, %s29
      %s23 = sphi 0, %s21
      %s24 = sphi 0, %s22
      %s25 = sphi 0, %s23
      %s26 = sphi 0, %s24
      %s38 = sphi 0, %s40
      %s41 = sphi 0, %s38
      %s42 = sphi 0, %s41
      %s58 = sphi 0, %s42
      %s62 = sphi 0, %s62
      %s64 = sphi 0, %s62
      %s65 = sphi 0, %s64
      %s79 = sphi 0, %s65
      %s83 = sphi 0, %s83
      %s85 = sphi 0, %s83
      %s86 = sphi 0, %s85
      %s100 = sphi 0, %s86
      %s104 = sphi 0, %s104
      %s106 = sphi 0, %s104
      %s107 = sphi 0, %s106
      %s121 = sphi 0, %s107
      %s125 = sphi 0, %s125
      %s127 = sphi 0, %s125
      %s128 = sphi 0, %s127
      %s142 = sphi 0, %s128
      %s150 = sphi 0, %s152
      %s153 = sphi 0, %s150
      %s154 = sphi 0, %s153
      %s170 = sphi 0, %s154
    $region4: #{dhfe_down_block2d.3} parent=1 // loop_header_branch
      %17 = sbr.rel (%p15) target = $region8
    $region5: #{dhfe_down_block2d.3} parent=1 // loop_body
      %s19 = ssub.s32 %s14, 1
      %s20 = ssub.s32 %s14, 2
      %s27 = sadd.s32 1, %s22
      %p28 = scmp.ge.s32.totalorder %s27, 1
      %s29 = scalar_select %p28, 0, %s27
      %s30 = sadd.s32 1, %s21
      %s31 = scalar_select %p28, %s30, %s21
      %p32 = scmp.ge.s32.totalorder %s31, 2
      %s33 = scalar_select %p32, 0, %s31
      %s34 = ssub.s32 %s21, %s33
      %s35 = ssub.s32 %s22, %s29
      %s36 = sor.u32 %s34, %s35
      %p37 = scmp.eq.s32.totalorder %s36, 0
      %s39 = sadd.s32 %s38, 1
      %s40 = scalar_select %p37, %s38, %s39
      %p43 = pneg %p37
      %p44 = scmp.eq.s32.totalorder %s14, 1
      %p45 = por %p43, %p44
      %p46 = scmp.ne.s32.totalorder %s38, %s41
      %p47 = scmp.eq.s32.totalorder %s14, 0
      %p48 = por %p46, %p47
      %p49 = scmp.ne.s32.totalorder %s38, %s41
      %p50 = scmp.eq.s32.totalorder %s19, 1
      %p51 = por %p49, %p50
      %p52 = scmp.ne.s32.totalorder %s41, %s42
      %p53 = scmp.eq.s32.totalorder %s19, 0
      %p54 = por %p52, %p53
      %p55 = scmp.ne.s32.totalorder %s41, %s42
      %p56 = scmp.eq.s32.totalorder %s20, 1
      %p57 = por %p55, %p56
      %p59 = scmp.ne.s32.totalorder %s42, %s58
      %p60 = scmp.eq.s32.totalorder %s20, 0
      %p61 = por %p59, %p60
      %s63 = sadd.s32 %s62, 1
      %p66 = scmp.eq.s32.totalorder %s14, 1
      %p67 = scmp.ne.s32.totalorder %s62, %s64
      %p68 = scmp.eq.s32.totalorder %s14, 0
      %p69 = por %p67, %p68
      %p70 = scmp.ne.s32.totalorder %s62, %s64
      %p71 = scmp.eq.s32.totalorder %s19, 1
      %p72 = por %p70, %p71
      %p73 = scmp.ne.s32.totalorder %s64, %s65
      %p74 = scmp.eq.s32.totalorder %s19, 0
      %p75 = por %p73, %p74
      %p76 = scmp.ne.s32.totalorder %s64, %s65
      %p77 = scmp.eq.s32.totalorder %s20, 1
      %p78 = por %p76, %p77
      %p80 = scmp.ne.s32.totalorder %s65, %s79
      %p81 = scmp.eq.s32.totalorder %s20, 0
      %p82 = por %p80, %p81
      %s84 = sadd.s32 %s83, 1
      %p87 = scmp.eq.s32.totalorder %s14, 1
      %p88 = scmp.ne.s32.totalorder %s83, %s85
      %p89 = scmp.eq.s32.totalorder %s14, 0
      %p90 = por %p88, %p89
      %p91 = scmp.ne.s32.totalorder %s83, %s85
      %p92 = scmp.eq.s32.totalorder %s19, 1
      %p93 = por %p91, %p92
      %p94 = scmp.ne.s32.totalorder %s85, %s86
      %p95 = scmp.eq.s32.totalorder %s19, 0
      %p96 = por %p94, %p95
      %p97 = scmp.ne.s32.totalorder %s85, %s86
      %p98 = scmp.eq.s32.totalorder %s20, 1
      %p99 = por %p97, %p98
      %p101 = scmp.ne.s32.totalorder %s86, %s100
      %p102 = scmp.eq.s32.totalorder %s20, 0
      %p103 = por %p101, %p102
      %s105 = sadd.s32 %s104, 1
      %p108 = scmp.eq.s32.totalorder %s14, 1
      %p109 = scmp.ne.s32.totalorder %s104, %s106
      %p110 = scmp.eq.s32.totalorder %s14, 0
      %p111 = por %p109, %p110
      %p112 = scmp.ne.s32.totalorder %s104, %s106
      %p113 = scmp.eq.s32.totalorder %s19, 1
      %p114 = por %p112, %p113
      %p115 = scmp.ne.s32.totalorder %s106, %s107
      %p116 = scmp.eq.s32.totalorder %s19, 0
      %p117 = por %p115, %p116
      %p118 = scmp.ne.s32.totalorder %s106, %s107
      %p119 = scmp.eq.s32.totalorder %s20, 1
      %p120 = por %p118, %p119
      %p122 = scmp.ne.s32.totalorder %s107, %s121
      %p123 = scmp.eq.s32.totalorder %s20, 0
      %p124 = por %p122, %p123
      %s126 = sadd.s32 %s125, 1
      %p129 = scmp.eq.s32.totalorder %s14, 1
      %p130 = scmp.ne.s32.totalorder %s125, %s127
      %p131 = scmp.eq.s32.totalorder %s14, 0
      %p132 = por %p130, %p131
      %p133 = scmp.ne.s32.totalorder %s125, %s127
      %p134 = scmp.eq.s32.totalorder %s19, 1
      %p135 = por %p133, %p134
      %p136 = scmp.ne.s32.totalorder %s127, %s128
      %p137 = scmp.eq.s32.totalorder %s19, 0
      %p138 = por %p136, %p137
      %p139 = scmp.ne.s32.totalorder %s127, %s128
      %p140 = scmp.eq.s32.totalorder %s20, 1
      %p141 = por %p139, %p140
      %p143 = scmp.ne.s32.totalorder %s128, %s142
      %p144 = scmp.eq.s32.totalorder %s20, 0
      %p145 = por %p143, %p144
      %s146 = ssub.s32 %s21, %s33
      %s147 = ssub.s32 %s22, %s29
      %s148 = sor.u32 %s146, %s147
      %p149 = scmp.eq.s32.totalorder %s148, 0
      %s151 = sadd.s32 %s150, 1
      %s152 = scalar_select %p149, %s150, %s151
      %p155 = pneg %p149
      %p156 = scmp.eq.s32.totalorder %s14, 1
      %p157 = por %p155, %p156
      %p158 = scmp.ne.s32.totalorder %s150, %s153
      %p159 = scmp.eq.s32.totalorder %s14, 0
      %p160 = por %p158, %p159
      %p161 = scmp.ne.s32.totalorder %s150, %s153
      %p162 = scmp.eq.s32.totalorder %s19, 1
      %p163 = por %p161, %p162
      %p164 = scmp.ne.s32.totalorder %s153, %s154
      %p165 = scmp.eq.s32.totalorder %s19, 0
      %p166 = por %p164, %p165
      %p167 = scmp.ne.s32.totalorder %s153, %s154
      %p168 = scmp.eq.s32.totalorder %s20, 1
      %p169 = por %p167, %p168
      %p171 = scmp.ne.s32.totalorder %s154, %s170
      %p172 = scmp.eq.s32.totalorder %s20, 0
      %p173 = por %p171, %p172
      %p174 = scmp.le.s32.totalorder 1, %s14
      %p175 = scmp.lt.s32.totalorder %s14, 3
      %p176 = pnand %p174, %p175
      %p177 = pneg %p176
      // Predicated region
      $region9: #{dhfe_down_block2d.3} parent=5 // pred_check
        _
      $region10: #{dhfe_down_block2d.3} parent=5 // pred_check_branch
        %179 = sbr.rel (%p176) target = $region12
      $region11: #{dhfe_down_block2d.3} parent=5 // pred_region
        %s180 = ssub.s32 %s14, 1
        // Predicated region
        $region13: #{dhfe_down_block2d.3} parent=11 // pred_check
          %p181 = pneg %p75
        $region14: #{dhfe_down_block2d.3} parent=11 // pred_check_branch
          %183 = sbr.rel (%p181) target = $region16
        $region15: #{dhfe_down_block2d.3} parent=11 // pred_region
          _
        $region16: #{dhfe_down_block2d.3} parent=11 // pred_fallthru
          _
        // Predicated region
        $region17: #{dhfe_down_block2d.3} parent=11 // pred_check
          %p184 = pneg %p96
        $region18: #{dhfe_down_block2d.3} parent=11 // pred_check_branch
          %186 = sbr.rel (%p184) target = $region20
        $region19: #{dhfe_down_block2d.3} parent=11 // pred_region
          _
        $region20: #{dhfe_down_block2d.3} parent=11 // pred_fallthru
          _
        // Predicated region
        $region21: #{dhfe_down_block2d.3} parent=11 // pred_check
          %p187 = pneg %p117
        $region22: #{dhfe_down_block2d.3} parent=11 // pred_check_branch
          %189 = sbr.rel (%p187) target = $region24
        $region23: #{dhfe_down_block2d.3} parent=11 // pred_region
          _
        $region24: #{dhfe_down_block2d.3} parent=11 // pred_fallthru
          _
        // Predicated region
        $region25: #{dhfe_down_block2d.3} parent=11 // pred_check
          %p190 = pneg %p138
        $region26: #{dhfe_down_block2d.3} parent=11 // pred_check_branch
          %192 = sbr.rel (%p190) target = $region28
        $region27: #{dhfe_down_block2d.3} parent=11 // pred_region
          _
        $region28: #{dhfe_down_block2d.3} parent=11 // pred_fallthru
          _
      $region12: #{dhfe_down_block2d.3} parent=5 // pred_fallthru
        _
      %p193 = scmp.lt.s32.totalorder %s14, 2
      // Predicated region
      $region29: #{dhfe_down_block2d.3} parent=5 // pred_check
        %p194 = pneg %p193
      $region30: #{dhfe_down_block2d.3} parent=5 // pred_check_branch
        %196 = sbr.rel (%p194) target = $region32
      $region31: #{dhfe_down_block2d.3} parent=5 // pred_region
        // Predicated region
        $region33: #{dhfe_down_block2d.3} parent=31 // pred_check
          %p197 = pneg %p48
        $region34: #{dhfe_down_block2d.3} parent=31 // pred_check_branch
          %199 = sbr.rel (%p197) target = $region36
        $region35: #{dhfe_down_block2d.3} parent=31 // pred_region
          %p200 = scmp.lt.s32.totalorder %s21, 1
          %s201 = scalar_select %p200, %s21, 1
          %p202 = scmp.lt.s32.totalorder %s22, 0
          %s203 = scalar_select %p202, %s22, 0
          %s204 = smul.addr %s201, 4
          %s205 = sadd.s32 %s203, %s204
          %s206 = smul.addr %s205, 8
          %s207 = scalar_lea.vmem %s0, %s206
        $region36: #{dhfe_down_block2d.3} parent=31 // pred_fallthru
          _
      $region32: #{dhfe_down_block2d.3} parent=5 // pred_fallthru
        _
      %p208 = scmp.le.s32.totalorder 1, %s14
      %p209 = scmp.lt.s32.totalorder %s14, 3
      %p210 = pnand %p208, %p209
      %p211 = pneg %p210
      // Predicated region
      $region37: #{dhfe_down_block2d.3} parent=5 // pred_check
        _
      $region38: #{dhfe_down_block2d.3} parent=5 // pred_check_branch
        %213 = sbr.rel (%p210) target = $region40
      $region39: #{dhfe_down_block2d.3} parent=5 // pred_region
        %s214 = ssub.s32 %s14, 1
        %p215 = scmp.lt.s32.totalorder %s23, 1
        %s216 = scalar_select %p215, %s23, 1
        %p217 = scmp.lt.s32.totalorder %s24, 0
        %s218 = scalar_select %p217, %s24, 0
        %s219 = smul.addr %s216, 4
        %s220 = sadd.s32 %s218, %s219
        %s221 = smul.addr %s220, 8
        %s222 = scalar_lea.vmem %s0, %s221
        %p223 = pneg %p54
        %p224 = pneg %p51
        %p225 = pneg %p75
        %p226 = pneg %p72
        %p227 = pneg %p96
        %p228 = pneg %p93
        %p229 = pneg %p117
        %p230 = pneg %p114
        %p231 = pneg %p138
        %p232 = pneg %p135
        %p233 = pneg %p166
        %p234 = pneg %p163
        %s235 = sand.u32 %s153, 1
        %s236 = scalar_lea.sflag [#allocation3], %s235
        %s237 = sand.u32 %s153, 1
        %s238 = smul.addr %s237, 64
        %s239 = scalar_lea.vmem [#allocation2], %s238
        %p240 = scmp.lt.s32.totalorder %s23, 1
        %s241 = scalar_select %p240, %s23, 1
        %p242 = scmp.lt.s32.totalorder %s24, 0
        %s243 = scalar_select %p242, %s24, 0
        %s244 = smul.addr %s241, 4
        %s245 = sadd.s32 %s243, %s244
        %s246 = smul.addr %s245, 8
        %s247 = scalar_lea.vmem %s0, %s246
        %v248 = vld [vmem:[%s247] sm:$0xff]
        %v249 = vld [vmem:[%s1] sm:$0x1]
        %v251 = vlaneseq
        %v252 = vshrl.u32 %v251, 7
        %v253 = vsub.s32 0, %v252
        %v254 = vrot.slane %v249, %v253
        %255 = vset.pattern.permute.xlu0 0
        %256 = vperm.xlu0 %255, %v254
        %v257 = vpop.permute.xlu0 %256
        %v259 = vmul.f32 %v248, %v257
        %v260 = vld [vmem:[%s2] sm:$0x1]
        %v262 = vlaneseq
        %v263 = vshrl.u32 %v262, 7
        %v264 = vsub.s32 0, %v263
        %v265 = vrot.slane %v260, %v264
        %266 = vset.pattern.permute.xlu0 0
        %267 = vperm.xlu0 %266, %v265
        %v268 = vpop.permute.xlu0 %267
        %v270 = vadd.f32 %v259, %v268
        %v271 = vmax.f32 %v270, 0.0
        %s272 = scalar_lea.vmem %s247, 8
        %v273 = vld [vmem:[%s272] sm:$0xff]
        %274 = vset.pattern.permute.xlu0 1
        %275 = vperm.xlu0 %274, %v254
        %v276 = vpop.permute.xlu0 %275
        %v278 = vmul.f32 %v273, %v276
        %279 = vset.pattern.permute.xlu0 1
        %280 = vperm.xlu0 %279, %v265
        %v281 = vpop.permute.xlu0 %280
        %v283 = vadd.f32 %v278, %v281
        %v284 = vmax.f32 %v283, 0.0
        %s285 = scalar_lea.vmem %s247, 16
        %v286 = vld [vmem:[%s285] sm:$0xff]
        %287 = vset.pattern.permute.xlu0 2
        %288 = vperm.xlu0 %287, %v254
        %v289 = vpop.permute.xlu0 %288
        %v291 = vmul.f32 %v286, %v289
        %292 = vset.pattern.permute.xlu0 2
        %293 = vperm.xlu0 %292, %v265
        %v294 = vpop.permute.xlu0 %293
        %v296 = vadd.f32 %v291, %v294
        %v297 = vmax.f32 %v296, 0.0
        %s298 = scalar_lea.vmem %s247, 24
        %v299 = vld [vmem:[%s298] sm:$0xff]
        %300 = vset.pattern.permute.xlu0 3
        %301 = vperm.xlu0 %300, %v254
        %v302 = vpop.permute.xlu0 %301
        %v304 = vmul.f32 %v299, %v302
        %305 = vset.pattern.permute.xlu0 3
        %306 = vperm.xlu0 %305, %v265
        %v307 = vpop.permute.xlu0 %306
        %v309 = vadd.f32 %v304, %v307
        %v310 = vmax.f32 %v309, 0.0
        %v311 = vld [vmem:[%s3] sm:$0x1]
        %s313 = vtos %v311
        %v314 = vstv %s313
        %v316 = vmul.f32 %v271, %v314
        %v317 = vadd.f32 %v316, 0.0
        %318 = vrot.lane.b32.xlu0 %v311, 127
        %v319 = vpop.permute.xlu0 %318
        %s320 = vtos %v319
        %v321 = vstv %s320
        %v323 = vmul.f32 %v284, %v321
        %v324 = vadd.f32 %v317, %v323
        %325 = vrot.lane.b32.xlu0 %v311, 126
        %v326 = vpop.permute.xlu0 %325
        %s327 = vtos %v326
        %v328 = vstv %s327
        %v330 = vmul.f32 %v297, %v328
        %v331 = vadd.f32 %v324, %v330
        %332 = vrot.lane.b32.xlu0 %v311, 125
        %v333 = vpop.permute.xlu0 %332
        %s334 = vtos %v333
        %v335 = vstv %s334
        %v337 = vmul.f32 %v310, %v335
        %v338 = vadd.f32 %v331, %v337
        %v339 = vld [vmem:[%s4] sm:$0x1]
        %v341 = vlaneseq
        %v342 = vshrl.u32 %v341, 7
        %v343 = vsub.s32 0, %v342
        %v344 = vrot.slane %v339, %v343
        %345 = vset.pattern.permute.xlu0 0
        %346 = vperm.xlu0 %345, %v344
        %v347 = vpop.permute.xlu0 %346
        %v349 = vadd.f32 %v338, %v347
        %v350 = vsub.f32 0.0, %v349
        %v351 = vmul.f32 %v350, 1.442695
        %v352 = vpow.pop %v351
        %v353 = vadd.f32 %v352, 1.0
        %v354 = vrcp.pop %v353
        %vm355 = vcmask 64512
        %356 = vst.msk [vmem:[%s239] sm:$0xff] %vm355, %v354
        %v357 = vld [vmem:[%s3 + $0x1] sm:$0x1]
        %s359 = vtos %v357
        %v360 = vstv %s359
        %v362 = vmul.f32 %v271, %v360
        %v363 = vadd.f32 %v362, 0.0
        %364 = vrot.lane.b32.xlu0 %v357, 127
        %v365 = vpop.permute.xlu0 %364
        %s366 = vtos %v365
        %v367 = vstv %s366
        %v369 = vmul.f32 %v284, %v367
        %v370 = vadd.f32 %v363, %v369
        %371 = vrot.lane.b32.xlu0 %v357, 126
        %v372 = vpop.permute.xlu0 %371
        %s373 = vtos %v372
        %v374 = vstv %s373
        %v376 = vmul.f32 %v297, %v374
        %v377 = vadd.f32 %v370, %v376
        %378 = vrot.lane.b32.xlu0 %v357, 125
        %v379 = vpop.permute.xlu0 %378
        %s380 = vtos %v379
        %v381 = vstv %s380
        %v383 = vmul.f32 %v310, %v381
        %v384 = vadd.f32 %v377, %v383
        %v385 = vld [vmem:[%s4] sm:$0x1]
        %v387 = vlaneseq
        %v388 = vshrl.u32 %v387, 7
        %v389 = vsub.s32 0, %v388
        %v390 = vrot.slane %v385, %v389
        %391 = vset.pattern.permute.xlu0 1
        %392 = vperm.xlu0 %391, %v390
        %v393 = vpop.permute.xlu0 %392
        %v395 = vadd.f32 %v384, %v393
        %v396 = vsub.f32 0.0, %v395
        %v397 = vmul.f32 %v396, 1.442695
        %v398 = vpow.pop %v397
        %v399 = vadd.f32 %v398, 1.0
        %v400 = vrcp.pop %v399
        %s401 = scalar_lea.vmem %s239, 8 [#allocation2]
        %402 = vst.msk [vmem:[%s401] sm:$0xff] %vm355, %v400
        %v403 = vld [vmem:[%s3 + $0x2] sm:$0x1]
        %s405 = vtos %v403
        %v406 = vstv %s405
        %v408 = vmul.f32 %v271, %v406
        %v409 = vadd.f32 %v408, 0.0
        %410 = vrot.lane.b32.xlu0 %v403, 127
        %v411 = vpop.permute.xlu0 %410
        %s412 = vtos %v411
        %v413 = vstv %s412
        %v415 = vmul.f32 %v284, %v413
        %v416 = vadd.f32 %v409, %v415
        %417 = vrot.lane.b32.xlu0 %v403, 126
        %v418 = vpop.permute.xlu0 %417
        %s419 = vtos %v418
        %v420 = vstv %s419
        %v422 = vmul.f32 %v297, %v420
        %v423 = vadd.f32 %v416, %v422
        %424 = vrot.lane.b32.xlu0 %v403, 125
        %v425 = vpop.permute.xlu0 %424
        %s426 = vtos %v425
        %v427 = vstv %s426
        %v429 = vmul.f32 %v310, %v427
        %v430 = vadd.f32 %v423, %v429
        %v431 = vld [vmem:[%s4] sm:$0x1]
        %v433 = vlaneseq
        %v434 = vshrl.u32 %v433, 7
        %v435 = vsub.s32 0, %v434
        %v436 = vrot.slane %v431, %v435
        %437 = vset.pattern.permute.xlu0 2
        %438 = vperm.xlu0 %437, %v436
        %v439 = vpop.permute.xlu0 %438
        %v441 = vadd.f32 %v430, %v439
        %v442 = vsub.f32 0.0, %v441
        %v443 = vmul.f32 %v442, 1.442695
        %v444 = vpow.pop %v443
        %v445 = vadd.f32 %v444, 1.0
        %v446 = vrcp.pop %v445
        %s447 = scalar_lea.vmem %s239, 16 [#allocation2]
        %448 = vst.msk [vmem:[%s447] sm:$0xff] %vm355, %v446
        %v449 = vld [vmem:[%s3 + $0x3] sm:$0x1]
        %s451 = vtos %v449
        %v452 = vstv %s451
        %v454 = vmul.f32 %v271, %v452
        %v455 = vadd.f32 %v454, 0.0
        %456 = vrot.lane.b32.xlu0 %v449, 127
        %v457 = vpop.permute.xlu0 %456
        %s458 = vtos %v457
        %v459 = vstv %s458
        %v461 = vmul.f32 %v284, %v459
        %v462 = vadd.f32 %v455, %v461
        %463 = vrot.lane.b32.xlu0 %v449, 126
        %v464 = vpop.permute.xlu0 %463
        %s465 = vtos %v464
        %v466 = vstv %s465
        %v468 = vmul.f32 %v297, %v466
        %v469 = vadd.f32 %v462, %v468
        %470 = vrot.lane.b32.xlu0 %v449, 125
        %v471 = vpop.permute.xlu0 %470
        %s472 = vtos %v471
        %v473 = vstv %s472
        %v475 = vmul.f32 %v310, %v473
        %v476 = vadd.f32 %v469, %v475
        %v477 = vld [vmem:[%s4] sm:$0x1]
        %v479 = vlaneseq
        %v480 = vshrl.u32 %v479, 7
        %v481 = vsub.s32 0, %v480
        %v482 = vrot.slane %v477, %v481
        %483 = vset.pattern.permute.xlu0 3
        %484 = vperm.xlu0 %483, %v482
        %v485 = vpop.permute.xlu0 %484
        %v487 = vadd.f32 %v476, %v485
        %v488 = vsub.f32 0.0, %v487
        %v489 = vmul.f32 %v488, 1.442695
        %v490 = vpow.pop %v489
        %v491 = vadd.f32 %v490, 1.0
        %v492 = vrcp.pop %v491
        %s493 = scalar_lea.vmem %s239, 24 [#allocation2]
        %494 = vst.msk [vmem:[%s493] sm:$0xff] %vm355, %v492
        %v495 = vld [vmem:[%s3 + $0x4] sm:$0x1]
        %s497 = vtos %v495
        %v498 = vstv %s497
        %v500 = vmul.f32 %v271, %v498
        %v501 = vadd.f32 %v500, 0.0
        %502 = vrot.lane.b32.xlu0 %v495, 127
        %v503 = vpop.permute.xlu0 %502
        %s504 = vtos %v503
        %v505 = vstv %s504
        %v507 = vmul.f32 %v284, %v505
        %v508 = vadd.f32 %v501, %v507
        %509 = vrot.lane.b32.xlu0 %v495, 126
        %v510 = vpop.permute.xlu0 %509
        %s511 = vtos %v510
        %v512 = vstv %s511
        %v514 = vmul.f32 %v297, %v512
        %v515 = vadd.f32 %v508, %v514
        %516 = vrot.lane.b32.xlu0 %v495, 125
        %v517 = vpop.permute.xlu0 %516
        %s518 = vtos %v517
        %v519 = vstv %s518
        %v521 = vmul.f32 %v310, %v519
        %v522 = vadd.f32 %v515, %v521
        %v523 = vld [vmem:[%s4] sm:$0x1]
        %v525 = vlaneseq
        %v526 = vshrl.u32 %v525, 7
        %v527 = vsub.s32 0, %v526
        %v528 = vrot.slane %v523, %v527
        %529 = vset.pattern.permute.xlu0 4
        %530 = vperm.xlu0 %529, %v528
        %v531 = vpop.permute.xlu0 %530
        %v533 = vadd.f32 %v522, %v531
        %v534 = vsub.f32 0.0, %v533
        %v535 = vmul.f32 %v534, 1.442695
        %v536 = vpow.pop %v535
        %v537 = vadd.f32 %v536, 1.0
        %v538 = vrcp.pop %v537
        %s539 = scalar_lea.vmem %s239, 32 [#allocation2]
        %540 = vst.msk [vmem:[%s539] sm:$0xff] %vm355, %v538
        %v541 = vld [vmem:[%s3 + $0x5] sm:$0x1]
        %s543 = vtos %v541
        %v544 = vstv %s543
        %v546 = vmul.f32 %v271, %v544
        %v547 = vadd.f32 %v546, 0.0
        %548 = vrot.lane.b32.xlu0 %v541, 127
        %v549 = vpop.permute.xlu0 %548
        %s550 = vtos %v549
        %v551 = vstv %s550
        %v553 = vmul.f32 %v284, %v551
        %v554 = vadd.f32 %v547, %v553
        %555 = vrot.lane.b32.xlu0 %v541, 126
        %v556 = vpop.permute.xlu0 %555
        %s557 = vtos %v556
        %v558 = vstv %s557
        %v560 = vmul.f32 %v297, %v558
        %v561 = vadd.f32 %v554, %v560
        %562 = vrot.lane.b32.xlu0 %v541, 125
        %v563 = vpop.permute.xlu0 %562
        %s564 = vtos %v563
        %v565 = vstv %s564
        %v567 = vmul.f32 %v310, %v565
        %v568 = vadd.f32 %v561, %v567
        %v569 = vld [vmem:[%s4] sm:$0x1]
        %v571 = vlaneseq
        %v572 = vshrl.u32 %v571, 7
        %v573 = vsub.s32 0, %v572
        %v574 = vrot.slane %v569, %v573
        %575 = vset.pattern.permute.xlu0 5
        %576 = vperm.xlu0 %575, %v574
        %v577 = vpop.permute.xlu0 %576
        %v579 = vadd.f32 %v568, %v577
        %v580 = vsub.f32 0.0, %v579
        %v581 = vmul.f32 %v580, 1.442695
        %v582 = vpow.pop %v581
        %v583 = vadd.f32 %v582, 1.0
        %v584 = vrcp.pop %v583
        %s585 = scalar_lea.vmem %s239, 40 [#allocation2]
        %586 = vst.msk [vmem:[%s585] sm:$0xff] %vm355, %v584
        %v587 = vld [vmem:[%s3 + $0x6] sm:$0x1]
        %s589 = vtos %v587
        %v590 = vstv %s589
        %v592 = vmul.f32 %v271, %v590
        %v593 = vadd.f32 %v592, 0.0
        %594 = vrot.lane.b32.xlu0 %v587, 127
        %v595 = vpop.permute.xlu0 %594
        %s596 = vtos %v595
        %v597 = vstv %s596
        %v599 = vmul.f32 %v284, %v597
        %v600 = vadd.f32 %v593, %v599
        %601 = vrot.lane.b32.xlu0 %v587, 126
        %v602 = vpop.permute.xlu0 %601
        %s603 = vtos %v602
        %v604 = vstv %s603
        %v606 = vmul.f32 %v297, %v604
        %v607 = vadd.f32 %v600, %v606
        %608 = vrot.lane.b32.xlu0 %v587, 125
        %v609 = vpop.permute.xlu0 %608
        %s610 = vtos %v609
        %v611 = vstv %s610
        %v613 = vmul.f32 %v310, %v611
        %v614 = vadd.f32 %v607, %v613
        %v615 = vld [vmem:[%s4] sm:$0x1]
        %v617 = vlaneseq
        %v618 = vshrl.u32 %v617, 7
        %v619 = vsub.s32 0, %v618
        %v620 = vrot.slane %v615, %v619
        %621 = vset.pattern.permute.xlu0 6
        %622 = vperm.xlu0 %621, %v620
        %v623 = vpop.permute.xlu0 %622
        %v625 = vadd.f32 %v614, %v623
        %v626 = vsub.f32 0.0, %v625
        %v627 = vmul.f32 %v626, 1.442695
        %v628 = vpow.pop %v627
        %v629 = vadd.f32 %v628, 1.0
        %v630 = vrcp.pop %v629
        %s631 = scalar_lea.vmem %s239, 48 [#allocation2]
        %632 = vst.msk [vmem:[%s631] sm:$0xff] %vm355, %v630
        %v633 = vld [vmem:[%s3 + $0x7] sm:$0x1]
        %s635 = vtos %v633
        %v636 = vstv %s635
        %v638 = vmul.f32 %v271, %v636
        %v639 = vadd.f32 %v638, 0.0
        %640 = vrot.lane.b32.xlu0 %v633, 127
        %v641 = vpop.permute.xlu0 %640
        %s642 = vtos %v641
        %v643 = vstv %s642
        %v645 = vmul.f32 %v284, %v643
        %v646 = vadd.f32 %v639, %v645
        %647 = vrot.lane.b32.xlu0 %v633, 126
        %v648 = vpop.permute.xlu0 %647
        %s649 = vtos %v648
        %v650 = vstv %s649
        %v652 = vmul.f32 %v297, %v650
        %v653 = vadd.f32 %v646, %v652
        %654 = vrot.lane.b32.xlu0 %v633, 125
        %v655 = vpop.permute.xlu0 %654
        %s656 = vtos %v655
        %v657 = vstv %s656
        %v659 = vmul.f32 %v310, %v657
        %v660 = vadd.f32 %v653, %v659
        %v661 = vld [vmem:[%s4] sm:$0x1]
        %v663 = vlaneseq
        %v664 = vshrl.u32 %v663, 7
        %v665 = vsub.s32 0, %v664
        %v666 = vrot.slane %v661, %v665
        %667 = vset.pattern.permute.xlu0 7
        %668 = vperm.xlu0 %667, %v666
        %v669 = vpop.permute.xlu0 %668
        %v671 = vadd.f32 %v660, %v669
        %v672 = vsub.f32 0.0, %v671
        %v673 = vmul.f32 %v672, 1.442695
        %v674 = vpow.pop %v673
        %v675 = vadd.f32 %v674, 1.0
        %v676 = vrcp.pop %v675
        %s677 = scalar_lea.vmem %s239, 56 [#allocation2]
        %678 = vst.msk [vmem:[%s677] sm:$0xff] %vm355, %v676
        %s679 = sand.u32 %s153, 1
        %s680 = scalar_lea.sflag [#allocation3], %s679
        %s681 = sand.u32 %s153, 1
        %s682 = smul.addr %s681, 64
        %s683 = scalar_lea.vmem [#allocation2], %s682
        // Predicated region
        $region41: #{dhfe_down_block2d.3} parent=39 // pred_check
          %p684 = pneg %p163
        $region42: #{dhfe_down_block2d.3} parent=39 // pred_check_branch
          %686 = sbr.rel (%p684) target = $region44
        $region43: #{dhfe_down_block2d.3} parent=39 // pred_region
          %s688 = ssub.s32 1024, 1024
          %689 = vsyncadd %s680, %s688
          %s690 = smul.addr %s23, 8
          %s691 = sadd.s32 %s24, %s690
          %s692 = smul.addr %s691, 128
          %s693 = scalar_lea.hbm %s5, %s692
          %s694 = sshll.u32 %s683, 4
          %s695 = int_to_ptr.vmem [resolvable:$true] %s694
          %700 = dma.vmem_to_hbm [thread:$0]  %s695, 1024, %s693, %s680, 128, 128, 8
        $region44: #{dhfe_down_block2d.3} parent=39 // pred_fallthru
          _
      $region40: #{dhfe_down_block2d.3} parent=5 // pred_fallthru
        _
      %p701 = scmp.le.s32.totalorder 2, %s14
      // Predicated region
      $region45: #{dhfe_down_block2d.3} parent=5 // pred_check
        %p702 = pneg %p701
      $region46: #{dhfe_down_block2d.3} parent=5 // pred_check_branch
        %704 = sbr.rel (%p702) target = $region48
      $region47: #{dhfe_down_block2d.3} parent=5 // pred_region
        %s705 = ssub.s32 %s14, 2
        // Predicated region
        $region49: #{dhfe_down_block2d.3} parent=47 // pred_check
          %p706 = pneg %p169
        $region50: #{dhfe_down_block2d.3} parent=47 // pred_check_branch
          %708 = sbr.rel (%p706) target = $region52
        $region51: #{dhfe_down_block2d.3} parent=47 // pred_region
          %s709 = sand.u32 %s154, 1
          %s710 = scalar_lea.sflag [#allocation3], %s709
          %s711 = sand.u32 %s154, 1
          %s712 = smul.addr %s711, 64
          %s713 = scalar_lea.vmem [#allocation2], %s712
          %714 = dma.done %s710, 1024
        $region52: #{dhfe_down_block2d.3} parent=47 // pred_fallthru
          _
      $region48: #{dhfe_down_block2d.3} parent=5 // pred_fallthru
        _
    $region6: #{dhfe_down_block2d.3} parent=1 // loop_footer
      %s18 = sadd.s32 1, %s14
    $region7: #{dhfe_down_block2d.3} parent=1 // loop_footer_branch
      %13 = sbr.rel target = $region3
    $region8: #{dhfe_down_block2d.3} parent=1 // loop_exit
      _
    %715 = vsyncpa [#allocation3], 1
    %s716 = scalar_lea.sflag [#allocation3], 1
    %717 = vsyncpa %s716, 1

</llo_original>
